<compile_context>
chip_gen: v5e
topology: v5e:2x2
jax: 0.10.0
libtpu: 0.0.40
codegen_flags: <defaults>
</compile_context>

<pallas_src>
import jax
import jax.numpy as jnp
import numpy as np
from jax.experimental import pallas as pl
from jax.experimental.pallas import tpu as pltpu

# Matches torch nn.RMSNorm default (eps=None -> finfo(f32).eps for f32 acts).
EPS = float(jnp.finfo(jnp.float32).eps)


def _rmsnorm(x, w):
    # x: (R, D) f32, w: (1, D) f32
    var = jnp.mean(x * x, axis=-1, keepdims=True)
    return x * jax.lax.rsqrt(var + EPS) * w


def stu_layer_kernel(
    x_ref,        # (TB, L, D)   input block: TB batch elements
    w_stu_ref,    # (1, D)  f32  stu_norm RMSNorm weight
    m_in_ref,     # (D, D)  bf16 M_inputs
    toe_ref,      # (K*L, L) bf16 stacked even-shift (x2) causal Toeplitz mats
    m_filt_ref,   # (K, D)  f32  M_filters
    w_mlp_ref,    # (1, D)  f32  mlp_norm RMSNorm weight
    wgu_ref,      # (D, 2I) bf16 concat(gate_proj, up_proj) (pre-transposed)
    wd_ref,       # (I, D)  bf16 down_proj (pre-transposed)
    out_ref,      # (TB, L, D)
):
    TB, L, D = x_ref.shape
    K = m_filt_ref.shape[0]
    I = wd_ref.shape[0]
    R = TB * L

    # Flatten (TB, L, D) -> (TB*L, D): matmuls see M = TB*L rows (free reshape
    # while L is a multiple of 8).
    x = x_ref[...].astype(jnp.float32).reshape(R, D)

    # ---------------- STU branch ----------------
    xn = _rmsnorm(x, w_stu_ref[...])
    # bf16 MXU matmul, f32 accumulate.
    x_proj = jnp.dot(xn.astype(jnp.bfloat16), m_in_ref[...],
                     preferred_element_type=jnp.float32)              # (R, D)

    toe = toe_ref[...]                                                 # (K*L, L) bf16
    m_filt = m_filt_ref[...]                                           # (K, D)  f32

    # Direct causal conv (== rfft/irfft path of torch `convolve`), as MXU work:
    #   spectral_plus + spectral_minus = sum_{even s<=t} 2*phi[s]*x_proj[t-s]
    #   phi = filt @ M_filters  =>  conv = sum_k M_filters[k] * (T_k @ x_proj)
    # with T_k the even-shift (x2) lower-triangular Toeplitz of filter k.
    # All K Toeplitz matmuls are stacked into one (K*L, L) @ (L, D) matmul per
    # batch element (no cross-batch leakage by construction).
    conv_parts = []
    for b in range(TB):                     # TB is a small static block size
        xp_b = x_proj[b * L:(b + 1) * L, :].astype(jnp.bfloat16)       # (L, D)
        conv_all = jnp.dot(toe, xp_b,
                           preferred_element_type=jnp.float32)         # (K*L, D)
        conv_all = conv_all.reshape(K, L, D)                           # aligned split
        # Combine with M_filters: sum_k m_filt[k, :] * conv_k  (K VPU FMAs).
        conv_parts.append(jnp.sum(conv_all * m_filt[:, None, :], axis=0))
    y = x + jnp.concatenate(conv_parts, axis=0)                        # residual

    # ---------------- MLP branch ----------------
    yn = _rmsnorm(y, w_mlp_ref[...])
    gu = jnp.dot(yn.astype(jnp.bfloat16), wgu_ref[...],
                 preferred_element_type=jnp.float32)                   # (R, 2I)
    gate = jax.nn.gelu(gu[:, :I], approximate=True)                    # tanh gelu
    up = gu[:, I:]
    mlp_out = jnp.dot((gate * up).astype(jnp.bfloat16), wd_ref[...],
                      preferred_element_type=jnp.float32)              # (R, D)

    # dropout(p=0) / eval mode -> identity
    out_ref[...] = (y + mlp_out).reshape(TB, L, D).astype(out_ref.dtype)


def _vmem_capacity_bytes():
    try:
        return int(pltpu.get_tpu_info().vmem_capacity_bytes)
    except Exception:
        return 64 * 1024 * 1024   # conservative: v7x per-TensorCore VMEM


def _pick_block_b(B, L, target_rows=256):
    """Batch-block size.  Keeps the (parallel) grid >= 2 steps whenever B > 1
    (v7x has 2 TensorCores and the DMA pipeline needs >= 2 steps), preferring
    the smallest block whose row count block_b*L reaches the MXU row target
    and an even grid length."""
    if B == 1:
        return 1
    proper = [d for d in range(1, B) if B % d == 0]        # grid = B//d >= 2
    want = min(target_rows, proper[-1] * L)
    candidates = [d for d in proper if d * L >= want] or [proper[-1]]
    even_grid = [d for d in candidates if (B // d) % 2 == 0]
    return min(even_grid or candidates)


def _const_spec(shape):
    """BlockSpec for a weight that is identical at every grid step: constant
    index_map + single-buffered (halves resident-weight VMEM)."""
    idx = lambda b: (0,) * len(shape)
    try:
        return pl.BlockSpec(shape, idx, pipeline_mode=pl.Buffered(buffer_count=1))
    except TypeError:   # older jax without pipeline_mode on BlockSpec
        return pl.BlockSpec(shape, idx)


def prepare_stu_layer_params(params):
    """One-time, batch-independent parameter preparation (hoisted out of the
    per-forward path): even-shift Toeplitz stack, fused gate/up weight, bf16
    matmul operands."""
    w_stu, m_in, filt, m_filt, w_mlp, wg, wu, wd = params
    L, K = filt.shape
    filt = filt.astype(jnp.float32)

    # T[k*L + t, s] = 2 * filt[t - s, k] if (t - s) >= 0 and even, else 0.
    # (spectral_plus + spectral_minus: odd-shift terms cancel, even double.)
    t_idx = jnp.arange(L)[:, None]
    s_idx = jnp.arange(L)[None, :]
    diff = t_idx - s_idx
    valid = (diff >= 0) & (diff % 2 == 0)
    toe = 2.0 * jnp.take(filt, jnp.clip(diff, 0, L - 1), axis=0)       # (L, L, K)
    toe = jnp.where(valid[..., None], toe, 0.0)
    toe = jnp.transpose(toe, (2, 0, 1)).reshape(K * L, L)              # (K*L, L)

    wgu = jnp.concatenate([wg, wu], axis=1)                            # (D, 2I)

    return (
        jnp.asarray(w_stu, jnp.float32).reshape(1, -1),
        jnp.asarray(m_in, jnp.bfloat16),
        toe.astype(jnp.bfloat16),
        jnp.asarray(m_filt, jnp.float32),
        jnp.asarray(w_mlp, jnp.float32).reshape(1, -1),
        wgu.astype(jnp.bfloat16),
        jnp.asarray(wd, jnp.bfloat16),
    )


def stu_layer_forward(x, prepared_params, input_pos=None, block_b=None):
    # input_pos unused: no decode cache in this forward (cache is None).
    del input_pos
    w_stu, m_in, toe, m_filt, w_mlp, wgu, wd = prepared_params
    B, L, D = x.shape
    K = m_filt.shape[0]
    KL = toe.shape[0]
    I = wd.shape[0]

    if block_b is None:
        block_b = _pick_block_b(B, L)
    # TODO(synk): pad the batch (or add a remainder grid step) for batch sizes
    #             with no suitable divisor (e.g. prime B at inference).
    assert B % block_b == 0, "batch must be divisible by block_b"
    grid = (B // block_b,)

    grid_spec = pltpu.PrefetchScalarGridSpec(
        num_scalar_prefetch=0,
        grid=grid,
        in_specs=[
            pl.BlockSpec((block_b, L, D), lambda b: (b, 0, 0)),
            _const_spec((1, D)),
            _const_spec((D, D)),
            _const_spec((KL, L)),
            _const_spec((K, D)),
            _const_spec((1, D)),
            _const_spec((D, 2 * I)),
            _const_spec((I, D)),
        ],
        out_specs=pl.BlockSpec((block_b, L, D), lambda b: (b, 0, 0)),
    )

    # Advisory cost estimate so XLA can schedule / overlap around the kernel.
    flops = (2 * B * L * D * D              # x_proj = xn @ M_inputs
             + 2 * B * (K * L) * L * D      # stacked Toeplitz conv matmuls
             + 2 * B * K * L * D            # combine with M_filters
             + 2 * B * L * D * (2 * I)      # fused gate/up projection
             + 2 * B * L * I * D            # down projection
             + 12 * B * L * D)              # norms / residuals / gating (rough)
    transcendentals = B * L * I + 2 * B * L         # tanh-gelu + rsqrt
    act_bytes = x.dtype.itemsize
    weight_bytes = (m_in.size * 2 + toe.size * 2 + m_filt.size * 4
                    + wgu.size * 2 + wd.size * 2 + 2 * D * 4)
    bytes_accessed = 2 * B * L * D * act_bytes + weight_bytes
    cost = pl.CostEstimate(flops=int(flops),
                           transcendentals=int(transcendentals),
                           bytes_accessed=int(bytes_accessed))

    # VMEM budget: raise the scoped limit only if the working set needs it and
    # never beyond the chip's physical capacity (v7x: 64 MiB per TensorCore).
    io_bytes = 2 * 2 * block_b * L * D * act_bytes          # x+out, double-buffered
    live_bytes = 4 * block_b * L * (4 * I + 8 * D)          # f32 intermediates (rough)
    vmem_needed = io_bytes + weight_bytes + live_bytes
    cp_kwargs = dict(dimension_semantics=("parallel",))
    if vmem_needed > 32 * 1024 * 1024:
        cap = _vmem_capacity_bytes() - (8 << 20)
        cp_kwargs["vmem_limit_bytes"] = int(min(vmem_needed + (4 << 20), cap))

    return pl.pallas_call(
        stu_layer_kernel,
        out_shape=jax.ShapeDtypeStruct((B, L, D), x.dtype),
        grid_spec=grid_spec,
        compiler_params=pltpu.CompilerParams(**cp_kwargs),
        cost_estimate=cost,
    )(x, w_stu, m_in, toe, m_filt, w_mlp, wgu, wd)


# ------------- pure-JAX reference (mirrors the torch code, incl. FFT conv) -------------
def _ref_convolve(u, v, n):
    bsz, L, d = u.shape
    sgn = jnp.ones((1, L, 1), jnp.float32)
    sgn = sgn.at[:, 1::2].multiply(-1.0)
    v_ = v.reshape(1, -1, d, 1).astype(jnp.float32)
    V = jnp.fft.rfft(v_, n=n, axis=1)
    U = jnp.stack([u, u * sgn], axis=-1).astype(jnp.float32)
    U = jnp.fft.rfft(U, n=n, axis=1)
    U_conv = jnp.fft.irfft(V * U, n=n, axis=1)[:, :L]
    U_plus, U_minus = U_conv[..., 0], U_conv[..., 1]
    U_minus = U_minus * sgn
    return U_plus, U_minus


def _ref_stu_layer(x, params, n):
    w_stu, m_in, filt, m_filt, w_mlp, wg, wu, wd = params

    def rms(z, w):
        return z * jax.lax.rsqrt(jnp.mean(z * z, -1, keepdims=True) + EPS) * w

    xn = rms(x, w_stu)
    x_proj = xn @ m_in
    phi = filt @ m_filt
    sp, sm = _ref_convolve(x_proj, phi, n)
    y = x + sp + sm

    yn = rms(y, w_mlp)
    gate = jax.nn.gelu(yn @ wg, approximate=True)
    up = yn @ wu
    return y + (gate * up) @ wd


if __name__ == "__main__":
    B, L, D, K, MLP_SCALE = 2, 8, 128, 8, 4
    I = D * MLP_SCALE
    n_fft = 16  # nearest_power_of_two(2*L - 1, round_up=True)

    key = jax.random.PRNGKey(0)
    ks = jax.random.split(key, 8)
    x = jax.random.normal(ks[0], (B, L, D), jnp.float32)

    # Deterministic synthetic parameters (module __init__ leaves them uninitialized).
    w_stu = jnp.ones((1, D), jnp.float32)                       # nn.RMSNorm weight init
    m_inputs = 0.02 * jax.random.normal(ks[1], (D, D), jnp.float32)
    stu_filters = jax.random.normal(ks[2], (L, K), jnp.float32)
    m_filters = 0.02 * jax.random.normal(ks[3], (K, D), jnp.float32)
    w_mlp = jnp.ones((1, D), jnp.float32)
    wg = 0.02 * jax.random.normal(ks[4], (D, I), jnp.float32)   # gate_proj (in, out)
    wu = 0.02 * jax.random.normal(ks[5], (D, I), jnp.float32)   # up_proj   (in, out)
    wd = 0.02 * jax.random.normal(ks[6], (I, D), jnp.float32)   # down_proj (in, out)

    params = (w_stu, m_inputs, stu_filters, m_filters, w_mlp, wg, wu, wd)

    # One-time parameter preparation (Toeplitz stack, fused gate/up, bf16).
    prepared = prepare_stu_layer_params(params)

    out = jax.block_until_ready(stu_layer_forward(x, prepared))

    ref = jax.block_until_ready(_ref_stu_layer(x, params, n_fft))
    # bf16 MXU operands with f32 accumulation -> loosen tolerance vs f32 ref.
    np.testing.assert_allclose(np.asarray(out), np.asarray(ref),
                               rtol=2e-2, atol=2e-2)
    print("KERNEL_OK")
</pallas_src>

<mosaic_0001>
module attributes {stable_mosaic.version = 11 : i64} {
  func.func @stu_layer_kernel(%arg0: i32, %arg1: memref<1x8x128xf32, #tpu.memory_space<vmem>>, %arg2: memref<1x128xf32, #tpu.memory_space<vmem>>, %arg3: memref<128x128xbf16, #tpu.memory_space<vmem>>, %arg4: memref<64x8xbf16, #tpu.memory_space<vmem>>, %arg5: memref<8x128xf32, #tpu.memory_space<vmem>>, %arg6: memref<1x128xf32, #tpu.memory_space<vmem>>, %arg7: memref<128x1024xbf16, #tpu.memory_space<vmem>>, %arg8: memref<512x128xbf16, #tpu.memory_space<vmem>>, %arg9: memref<1x8x128xf32, #tpu.memory_space<vmem>>) attributes {dimension_semantics = [#tpu.dimension_semantics<parallel>], iteration_bounds = array<i64: 2>, scalar_prefetch = 0 : i64, scratch_operands = 0 : i64, tpu.core_type = #tpu.core_type<tc>, window_params = [{transform_indices = @transform_0, window_bounds = array<i64: 1, 8, 128>}, {pipeline_mode = #tpu.pipeline_mode<synchronous>, transform_indices = @transform_1, window_bounds = array<i64: 1, 128>}, {pipeline_mode = #tpu.pipeline_mode<synchronous>, transform_indices = @transform_2, window_bounds = array<i64: 128, 128>}, {pipeline_mode = #tpu.pipeline_mode<synchronous>, transform_indices = @transform_3, window_bounds = array<i64: 64, 8>}, {pipeline_mode = #tpu.pipeline_mode<synchronous>, transform_indices = @transform_4, window_bounds = array<i64: 8, 128>}, {pipeline_mode = #tpu.pipeline_mode<synchronous>, transform_indices = @transform_5, window_bounds = array<i64: 1, 128>}, {pipeline_mode = #tpu.pipeline_mode<synchronous>, transform_indices = @transform_6, window_bounds = array<i64: 128, 1024>}, {pipeline_mode = #tpu.pipeline_mode<synchronous>, transform_indices = @transform_7, window_bounds = array<i64: 512, 128>}, {transform_indices = @transform_8, window_bounds = array<i64: 1, 8, 128>}]} {
    %c0 = arith.constant 0 : index
    %c0_0 = arith.constant 0 : index
    %c0_1 = arith.constant 0 : index
    %0 = vector.load %arg1[%c0, %c0_0, %c0_1] : memref<1x8x128xf32, #tpu.memory_space<vmem>>, vector<1x8x128xf32>
    %1 = vector.shape_cast %0 : vector<1x8x128xf32> to vector<8x128xf32>
    %c0_2 = arith.constant 0 : index
    %c0_3 = arith.constant 0 : index
    %2 = vector.load %arg2[%c0_2, %c0_3] : memref<1x128xf32, #tpu.memory_space<vmem>>, vector<1x128xf32>
    %3 = arith.mulf %1, %1 : vector<8x128xf32>
    %cst = arith.constant dense<0.000000e+00> : vector<8xf32>
    %4 = vector.multi_reduction <add>, %3, %cst [1] : vector<8x128xf32> to vector<8xf32>
    %5 = vector.shape_cast %4 : vector<8xf32> to vector<8x1xf32>
    %cst_4 = arith.constant 1.280000e+02 : f32
    %6 = vector.broadcast %cst_4 : f32 to vector<8x1xf32>
    %7 = arith.divf %5, %6 : vector<8x1xf32>
    %cst_5 = arith.constant 1.1920929E-7 : f32
    %8 = vector.broadcast %cst_5 : f32 to vector<8x1xf32>
    %9 = arith.addf %7, %8 : vector<8x1xf32>
    %10 = math.rsqrt %9 : vector<8x1xf32>
    %11 = vector.broadcast %10 : vector<8x1xf32> to vector<8x128xf32>
    %12 = arith.mulf %1, %11 : vector<8x128xf32>
    %13 = vector.broadcast %2 : vector<1x128xf32> to vector<8x128xf32>
    %14 = arith.mulf %12, %13 : vector<8x128xf32>
    %15 = arith.truncf %14 : vector<8x128xf32> to vector<8x128xbf16>
    %c0_6 = arith.constant 0 : index
    %c0_7 = arith.constant 0 : index
    %16 = vector.load %arg3[%c0_6, %c0_7] : memref<128x128xbf16, #tpu.memory_space<vmem>>, vector<128x128xbf16>
    %cst_8 = arith.constant dense<0.000000e+00> : vector<8x128xf32>
    %17 = tpu.matmul %15, %16, %cst_8 {dimension_numbers = #tpu.dot_dimension_numbers<[1], [0], [0], [1], [0, 0, 1, 1], [], []>} : vector<8x128xbf16>, vector<128x128xbf16>, vector<8x128xf32> -> vector<8x128xf32>
    %c0_9 = arith.constant 0 : index
    %c0_10 = arith.constant 0 : index
    %18 = vector.load %arg4[%c0_9, %c0_10] : memref<64x8xbf16, #tpu.memory_space<vmem>>, vector<64x8xbf16>
    %c0_11 = arith.constant 0 : index
    %c0_12 = arith.constant 0 : index
    %19 = vector.load %arg5[%c0_11, %c0_12] : memref<8x128xf32, #tpu.memory_space<vmem>>, vector<8x128xf32>
    %20 = arith.truncf %17 : vector<8x128xf32> to vector<8x128xbf16>
    %cst_13 = arith.constant dense<0.000000e+00> : vector<64x128xf32>
    %21 = tpu.matmul %18, %20, %cst_13 {dimension_numbers = #tpu.dot_dimension_numbers<[1], [0], [0], [1], [0, 0, 1, 1], [], []>} : vector<64x8xbf16>, vector<8x128xbf16>, vector<64x128xf32> -> vector<64x128xf32>
    %22 = vector.shape_cast %21 : vector<64x128xf32> to vector<8x8x128xf32>
    %23 = vector.shape_cast %19 : vector<8x128xf32> to vector<8x1x128xf32>
    %24 = vector.broadcast %23 : vector<8x1x128xf32> to vector<8x8x128xf32>
    %25 = arith.mulf %22, %24 : vector<8x8x128xf32>
    %cst_14 = arith.constant dense<0.000000e+00> : vector<8x128xf32>
    %26 = vector.multi_reduction <add>, %25, %cst_14 [0] : vector<8x8x128xf32> to vector<8x128xf32>
    %27 = arith.addf %1, %26 : vector<8x128xf32>
    %c0_15 = arith.constant 0 : index
    %c0_16 = arith.constant 0 : index
    %28 = vector.load %arg6[%c0_15, %c0_16] : memref<1x128xf32, #tpu.memory_space<vmem>>, vector<1x128xf32>
    %29 = arith.mulf %27, %27 : vector<8x128xf32>
    %cst_17 = arith.constant dense<0.000000e+00> : vector<8xf32>
    %30 = vector.multi_reduction <add>, %29, %cst_17 [1] : vector<8x128xf32> to vector<8xf32>
    %31 = vector.shape_cast %30 : vector<8xf32> to vector<8x1xf32>
    %cst_18 = arith.constant 1.280000e+02 : f32
    %32 = vector.broadcast %cst_18 : f32 to vector<8x1xf32>
    %33 = arith.divf %31, %32 : vector<8x1xf32>
    %cst_19 = arith.constant 1.1920929E-7 : f32
    %34 = vector.broadcast %cst_19 : f32 to vector<8x1xf32>
    %35 = arith.addf %33, %34 : vector<8x1xf32>
    %36 = math.rsqrt %35 : vector<8x1xf32>
    %37 = vector.broadcast %36 : vector<8x1xf32> to vector<8x128xf32>
    %38 = arith.mulf %27, %37 : vector<8x128xf32>
    %39 = vector.broadcast %28 : vector<1x128xf32> to vector<8x128xf32>
    %40 = arith.mulf %38, %39 : vector<8x128xf32>
    %41 = arith.truncf %40 : vector<8x128xf32> to vector<8x128xbf16>
    %c0_20 = arith.constant 0 : index
    %c0_21 = arith.constant 0 : index
    %42 = vector.load %arg7[%c0_20, %c0_21] : memref<128x1024xbf16, #tpu.memory_space<vmem>>, vector<128x1024xbf16>
    %cst_22 = arith.constant dense<0.000000e+00> : vector<8x1024xf32>
    %43 = tpu.matmul %41, %42, %cst_22 {dimension_numbers = #tpu.dot_dimension_numbers<[1], [0], [0], [1], [0, 0, 1, 1], [], []>} : vector<8x128xbf16>, vector<128x1024xbf16>, vector<8x1024xf32> -> vector<8x1024xf32>
    %44 = vector.extract_strided_slice %43 {offsets = [0, 0], sizes = [8, 512], strides = [1, 1]} : vector<8x1024xf32> to vector<8x512xf32>
    %45 = arith.mulf %44, %44 : vector<8x512xf32>
    %46 = arith.mulf %44, %45 : vector<8x512xf32>
    %cst_23 = arith.constant 4.471500e-02 : f32
    %47 = vector.broadcast %cst_23 : f32 to vector<8x512xf32>
    %48 = arith.mulf %47, %46 : vector<8x512xf32>
    %49 = arith.addf %44, %48 : vector<8x512xf32>
    %cst_24 = arith.constant 0.797884583 : f32
    %50 = vector.broadcast %cst_24 : f32 to vector<8x512xf32>
    %51 = arith.mulf %50, %49 : vector<8x512xf32>
    %52 = math.tanh %51 : vector<8x512xf32>
    %cst_25 = arith.constant 1.000000e+00 : f32
    %53 = vector.broadcast %cst_25 : f32 to vector<8x512xf32>
    %54 = arith.addf %53, %52 : vector<8x512xf32>
    %cst_26 = arith.constant 5.000000e-01 : f32
    %55 = vector.broadcast %cst_26 : f32 to vector<8x512xf32>
    %56 = arith.mulf %55, %54 : vector<8x512xf32>
    %57 = arith.mulf %44, %56 : vector<8x512xf32>
    %58 = vector.extract_strided_slice %43 {offsets = [0, 512], sizes = [8, 512], strides = [1, 1]} : vector<8x1024xf32> to vector<8x512xf32>
    %59 = arith.mulf %57, %58 : vector<8x512xf32>
    %60 = arith.truncf %59 : vector<8x512xf32> to vector<8x512xbf16>
    %c0_27 = arith.constant 0 : index
    %c0_28 = arith.constant 0 : index
    %61 = vector.load %arg8[%c0_27, %c0_28] : memref<512x128xbf16, #tpu.memory_space<vmem>>, vector<512x128xbf16>
    %cst_29 = arith.constant dense<0.000000e+00> : vector<8x128xf32>
    %62 = tpu.matmul %60, %61, %cst_29 {dimension_numbers = #tpu.dot_dimension_numbers<[1], [0], [0], [1], [0, 0, 1, 1], [], []>} : vector<8x512xbf16>, vector<512x128xbf16>, vector<8x128xf32> -> vector<8x128xf32>
    %63 = arith.addf %27, %62 : vector<8x128xf32>
    %64 = vector.shape_cast %63 : vector<8x128xf32> to vector<1x8x128xf32>
    %c0_30 = arith.constant 0 : index
    %c0_31 = arith.constant 0 : index
    %c0_32 = arith.constant 0 : index
    %65 = vector.load %arg9[%c0_30, %c0_31, %c0_32] : memref<1x8x128xf32, #tpu.memory_space<vmem>>, vector<1x8x128xf32>
    tpu.vector_store %arg9[%c0_30, %c0_31, %c0_32], %64 {strides = array<i32>} : memref<1x8x128xf32, #tpu.memory_space<vmem>>, vector<1x8x128xf32>,
    return
  }
  func.func @transform_0(%arg0: i32) -> (i32, i32, i32) {
    %c0_i32 = arith.constant 0 : i32
    %c0_i32_0 = arith.constant 0 : i32
    %c0_i32_1 = arith.constant 0 : i32
    return %arg0, %c0_i32, %c0_i32_0 : i32, i32, i32
  }
  func.func @transform_1(%arg0: i32) -> (i32, i32) {
    %c0_i32 = arith.constant 0 : i32
    %c0_i32_0 = arith.constant 0 : i32
    %c0_i32_1 = arith.constant 0 : i32
    return %c0_i32, %c0_i32_0 : i32, i32
  }
  func.func @transform_2(%arg0: i32) -> (i32, i32) {
    %c0_i32 = arith.constant 0 : i32
    %c0_i32_0 = arith.constant 0 : i32
    %c0_i32_1 = arith.constant 0 : i32
    return %c0_i32, %c0_i32_0 : i32, i32
  }
  func.func @transform_3(%arg0: i32) -> (i32, i32) {
    %c0_i32 = arith.constant 0 : i32
    %c0_i32_0 = arith.constant 0 : i32
    %c0_i32_1 = arith.constant 0 : i32
    return %c0_i32, %c0_i32_0 : i32, i32
  }
  func.func @transform_4(%arg0: i32) -> (i32, i32) {
    %c0_i32 = arith.constant 0 : i32
    %c0_i32_0 = arith.constant 0 : i32
    %c0_i32_1 = arith.constant 0 : i32
    return %c0_i32, %c0_i32_0 : i32, i32
  }
  func.func @transform_5(%arg0: i32) -> (i32, i32) {
    %c0_i32 = arith.constant 0 : i32
    %c0_i32_0 = arith.constant 0 : i32
    %c0_i32_1 = arith.constant 0 : i32
    return %c0_i32, %c0_i32_0 : i32, i32
  }
  func.func @transform_6(%arg0: i32) -> (i32, i32) {
    %c0_i32 = arith.constant 0 : i32
    %c0_i32_0 = arith.constant 0 : i32
    %c0_i32_1 = arith.constant 0 : i32
    return %c0_i32, %c0_i32_0 : i32, i32
  }
  func.func @transform_7(%arg0: i32) -> (i32, i32) {
    %c0_i32 = arith.constant 0 : i32
    %c0_i32_0 = arith.constant 0 : i32
    %c0_i32_1 = arith.constant 0 : i32
    return %c0_i32, %c0_i32_0 : i32, i32
  }
  func.func @transform_8(%arg0: i32) -> (i32, i32, i32) {
    %c0_i32 = arith.constant 0 : i32
    %c0_i32_0 = arith.constant 0 : i32
    %c0_i32_1 = arith.constant 0 : i32
    return %arg0, %c0_i32, %c0_i32_0 : i32, i32, i32
  }
}

</mosaic_0001>

<llo_original>
// kernel: tpu_custom_call.1
$region0: #{tpu_custom_call.1}
  #allocation0 [shape = 'u32[]', space=smem, size = 0x4, offset = 0x4, fixed_abs, tag = 'smem constant byte address 0x4 - core index']
  #allocation1 [shape = 'u32[72,128]{1,0:T(1,128)}', space=vmem, size = 0x9000, scoped, tag = 'internal scratch']
  %s0 = inlined_call_operand.vmem [shape: f32[2,8,128], index: 0, kind: input, shape index: {}]
  %s1 = inlined_call_operand.vmem [shape: f32[1,128], index: 1, kind: input, shape index: {}]
  %s2 = inlined_call_operand.hbm [shape: bf16[128,128], index: 2, kind: input, shape index: {}]
  %s3 = inlined_call_operand.vmem [shape: bf16[64,8], index: 3, kind: input, shape index: {}]
  %s4 = inlined_call_operand.vmem [shape: f32[8,128], index: 4, kind: input, shape index: {}]
  %s5 = inlined_call_operand.vmem [shape: f32[1,128], index: 5, kind: input, shape index: {}]
  %s6 = inlined_call_operand.hbm [shape: bf16[128,1024], index: 6, kind: input, shape index: {}]
  %s7 = inlined_call_operand.hbm [shape: bf16[512,128], index: 7, kind: input, shape index: {}]
  %s8 = inlined_call_operand.hbm [shape: f32[2,8,128], index: 8, kind: output, shape index: {}]
  %s9 = sld [smem:[#allocation0]]
  $region77: #{tpu_custom_call.1} parent=0
    _
  %s11 = ssub.s32 1, %s9
  %s12 = scalar_select 0, %s11, %s9
  $region1: #{tpu_custom_call.1} parent=0
    #allocation2 [shape = 'u8[32768]{0}', space=vmem, size = 0x8000, scoped, tag = 'input window, operand 2, single buffered']
    #allocation3 [shape = 's32[2]{0}', space=sflag, size = 0x8, scoped, tag = 'scoped memory for tpu_custom_call.1']
    #allocation4 [shape = 's32[2]{0}', space=sflag, size = 0x8, scoped, tag = 'scoped memory for tpu_custom_call.1']
    #allocation5 [shape = 'u8[262144]{0}', space=vmem, size = 0x40000, scoped, tag = 'input window, operand 6, single buffered']
    #allocation6 [shape = 's32[1]{0}', space=sflag, size = 0x4, scoped, tag = 'scoped memory for tpu_custom_call.1']
    #allocation7 [shape = 'u8[131072]{0}', space=vmem, size = 0x20000, scoped, tag = 'input window, operand 7, single buffered']
    #allocation8 [shape = 'u8[8192]{0}', space=vmem, size = 0x2000, scoped, tag = 'output window, operand 0']
    %13 = vsyncpa [#allocation3], 0
    %14 = vsyncpa [#allocation6], 0
    %15 = vsyncpa [#allocation4], 0
    %s16 = scalar_lea.sflag [#allocation4], 1
    %17 = vsyncpa %s16, 0
    loop: start=0, step=1, limit=4
    $region2: #{tpu_custom_call.1} parent=1 // loop_pre_header
      _
    $region3: #{tpu_custom_call.1} parent=1 // loop_header
      %s19 = sphi 0, %s23
      %p20 = scmp.ge.s32.totalorder %s19, 4
      %s29 = sphi 0, %s31
      %s32 = sphi 0, %s29
      %s33 = sphi 0, %s32
      %s49 = sphi 0, %s33
      %s53 = sphi 0, %s53
      %s55 = sphi 0, %s53
      %s56 = sphi 0, %s55
      %s70 = sphi 0, %s56
      %s74 = sphi 0, %s74
      %s76 = sphi 0, %s74
      %s77 = sphi 0, %s76
      %s91 = sphi 0, %s77
      %s95 = sphi 0, %s95
      %s97 = sphi 0, %s95
      %s98 = sphi 0, %s97
      %s112 = sphi 0, %s98
      %s116 = sphi 0, %s116
      %s118 = sphi 0, %s116
      %s119 = sphi 0, %s118
      %s133 = sphi 0, %s119
      %s137 = sphi 0, %s137
      %s139 = sphi 0, %s137
      %s140 = sphi 0, %s139
      %s154 = sphi 0, %s140
      %s158 = sphi 0, %s158
      %s160 = sphi 0, %s158
      %s161 = sphi 0, %s160
      %s175 = sphi 0, %s161
      %s179 = sphi 0, %s179
      %s181 = sphi 0, %s179
      %s182 = sphi 0, %s181
      %s196 = sphi 0, %s182
      %s202 = sphi 0, %s204
      %s205 = sphi 0, %s202
      %s206 = sphi 0, %s205
      %s222 = sphi 0, %s206
    $region4: #{tpu_custom_call.1} parent=1 // loop_header_branch
      %22 = sbr.rel (%p20) target = $region8
    $region5: #{tpu_custom_call.1} parent=1 // loop_body
      %s24 = ssub.s32 %s19, 1
      %s25 = ssub.s32 %s19, 2
      %s26 = sadd.s32 %s19, 1
      %s27 = ssub.s32 %s19, %s26
      %p28 = scmp.eq.s32.totalorder %s27, 0
      %s30 = sadd.s32 %s29, 1
      %s31 = scalar_select %p28, %s29, %s30
      %p34 = pneg %p28
      %p35 = scmp.eq.s32.totalorder %s19, 1
      %p36 = por %p34, %p35
      %p37 = scmp.ne.s32.totalorder %s29, %s32
      %p38 = scmp.eq.s32.totalorder %s19, 0
      %p39 = por %p37, %p38
      %p40 = scmp.ne.s32.totalorder %s29, %s32
      %p41 = scmp.eq.s32.totalorder %s24, 1
      %p42 = por %p40, %p41
      %p43 = scmp.ne.s32.totalorder %s32, %s33
      %p44 = scmp.eq.s32.totalorder %s24, 0
      %p45 = por %p43, %p44
      %p46 = scmp.ne.s32.totalorder %s32, %s33
      %p47 = scmp.eq.s32.totalorder %s25, 1
      %p48 = por %p46, %p47
      %p50 = scmp.ne.s32.totalorder %s33, %s49
      %p51 = scmp.eq.s32.totalorder %s25, 0
      %p52 = por %p50, %p51
      %s54 = sadd.s32 %s53, 1
      %p57 = scmp.eq.s32.totalorder %s19, 1
      %p58 = scmp.ne.s32.totalorder %s53, %s55
      %p59 = scmp.eq.s32.totalorder %s19, 0
      %p60 = por %p58, %p59
      %p61 = scmp.ne.s32.totalorder %s53, %s55
      %p62 = scmp.eq.s32.totalorder %s24, 1
      %p63 = por %p61, %p62
      %p64 = scmp.ne.s32.totalorder %s55, %s56
      %p65 = scmp.eq.s32.totalorder %s24, 0
      %p66 = por %p64, %p65
      %p67 = scmp.ne.s32.totalorder %s55, %s56
      %p68 = scmp.eq.s32.totalorder %s25, 1
      %p69 = por %p67, %p68
      %p71 = scmp.ne.s32.totalorder %s56, %s70
      %p72 = scmp.eq.s32.totalorder %s25, 0
      %p73 = por %p71, %p72
      %s75 = sadd.s32 %s74, 1
      %p78 = scmp.eq.s32.totalorder %s19, 1
      %p79 = scmp.ne.s32.totalorder %s74, %s76
      %p80 = scmp.eq.s32.totalorder %s19, 0
      %p81 = por %p79, %p80
      %p82 = scmp.ne.s32.totalorder %s74, %s76
      %p83 = scmp.eq.s32.totalorder %s24, 1
      %p84 = por %p82, %p83
      %p85 = scmp.ne.s32.totalorder %s76, %s77
      %p86 = scmp.eq.s32.totalorder %s24, 0
      %p87 = por %p85, %p86
      %p88 = scmp.ne.s32.totalorder %s76, %s77
      %p89 = scmp.eq.s32.totalorder %s25, 1
      %p90 = por %p88, %p89
      %p92 = scmp.ne.s32.totalorder %s77, %s91
      %p93 = scmp.eq.s32.totalorder %s25, 0
      %p94 = por %p92, %p93
      %s96 = sadd.s32 %s95, 1
      %p99 = scmp.eq.s32.totalorder %s19, 1
      %p100 = scmp.ne.s32.totalorder %s95, %s97
      %p101 = scmp.eq.s32.totalorder %s19, 0
      %p102 = por %p100, %p101
      %p103 = scmp.ne.s32.totalorder %s95, %s97
      %p104 = scmp.eq.s32.totalorder %s24, 1
      %p105 = por %p103, %p104
      %p106 = scmp.ne.s32.totalorder %s97, %s98
      %p107 = scmp.eq.s32.totalorder %s24, 0
      %p108 = por %p106, %p107
      %p109 = scmp.ne.s32.totalorder %s97, %s98
      %p110 = scmp.eq.s32.totalorder %s25, 1
      %p111 = por %p109, %p110
      %p113 = scmp.ne.s32.totalorder %s98, %s112
      %p114 = scmp.eq.s32.totalorder %s25, 0
      %p115 = por %p113, %p114
      %s117 = sadd.s32 %s116, 1
      %p120 = scmp.eq.s32.totalorder %s19, 1
      %p121 = scmp.ne.s32.totalorder %s116, %s118
      %p122 = scmp.eq.s32.totalorder %s19, 0
      %p123 = por %p121, %p122
      %p124 = scmp.ne.s32.totalorder %s116, %s118
      %p125 = scmp.eq.s32.totalorder %s24, 1
      %p126 = por %p124, %p125
      %p127 = scmp.ne.s32.totalorder %s118, %s119
      %p128 = scmp.eq.s32.totalorder %s24, 0
      %p129 = por %p127, %p128
      %p130 = scmp.ne.s32.totalorder %s118, %s119
      %p131 = scmp.eq.s32.totalorder %s25, 1
      %p132 = por %p130, %p131
      %p134 = scmp.ne.s32.totalorder %s119, %s133
      %p135 = scmp.eq.s32.totalorder %s25, 0
      %p136 = por %p134, %p135
      %s138 = sadd.s32 %s137, 1
      %p141 = scmp.eq.s32.totalorder %s19, 1
      %p142 = scmp.ne.s32.totalorder %s137, %s139
      %p143 = scmp.eq.s32.totalorder %s19, 0
      %p144 = por %p142, %p143
      %p145 = scmp.ne.s32.totalorder %s137, %s139
      %p146 = scmp.eq.s32.totalorder %s24, 1
      %p147 = por %p145, %p146
      %p148 = scmp.ne.s32.totalorder %s139, %s140
      %p149 = scmp.eq.s32.totalorder %s24, 0
      %p150 = por %p148, %p149
      %p151 = scmp.ne.s32.totalorder %s139, %s140
      %p152 = scmp.eq.s32.totalorder %s25, 1
      %p153 = por %p151, %p152
      %p155 = scmp.ne.s32.totalorder %s140, %s154
      %p156 = scmp.eq.s32.totalorder %s25, 0
      %p157 = por %p155, %p156
      %s159 = sadd.s32 %s158, 1
      %p162 = scmp.eq.s32.totalorder %s19, 1
      %p163 = scmp.ne.s32.totalorder %s158, %s160
      %p164 = scmp.eq.s32.totalorder %s19, 0
      %p165 = por %p163, %p164
      %p166 = scmp.ne.s32.totalorder %s158, %s160
      %p167 = scmp.eq.s32.totalorder %s24, 1
      %p168 = por %p166, %p167
      %p169 = scmp.ne.s32.totalorder %s160, %s161
      %p170 = scmp.eq.s32.totalorder %s24, 0
      %p171 = por %p169, %p170
      %p172 = scmp.ne.s32.totalorder %s160, %s161
      %p173 = scmp.eq.s32.totalorder %s25, 1
      %p174 = por %p172, %p173
      %p176 = scmp.ne.s32.totalorder %s161, %s175
      %p177 = scmp.eq.s32.totalorder %s25, 0
      %p178 = por %p176, %p177
      %s180 = sadd.s32 %s179, 1
      %p183 = scmp.eq.s32.totalorder %s19, 1
      %p184 = scmp.ne.s32.totalorder %s179, %s181
      %p185 = scmp.eq.s32.totalorder %s19, 0
      %p186 = por %p184, %p185
      %p187 = scmp.ne.s32.totalorder %s179, %s181
      %p188 = scmp.eq.s32.totalorder %s24, 1
      %p189 = por %p187, %p188
      %p190 = scmp.ne.s32.totalorder %s181, %s182
      %p191 = scmp.eq.s32.totalorder %s24, 0
      %p192 = por %p190, %p191
      %p193 = scmp.ne.s32.totalorder %s181, %s182
      %p194 = scmp.eq.s32.totalorder %s25, 1
      %p195 = por %p193, %p194
      %p197 = scmp.ne.s32.totalorder %s182, %s196
      %p198 = scmp.eq.s32.totalorder %s25, 0
      %p199 = por %p197, %p198
      %s200 = ssub.s32 %s19, %s26
      %p201 = scmp.eq.s32.totalorder %s200, 0
      %s203 = sadd.s32 %s202, 1
      %s204 = scalar_select %p201, %s202, %s203
      %p207 = pneg %p201
      %p208 = scmp.eq.s32.totalorder %s19, 1
      %p209 = por %p207, %p208
      %p210 = scmp.ne.s32.totalorder %s202, %s205
      %p211 = scmp.eq.s32.totalorder %s19, 0
      %p212 = por %p210, %p211
      %p213 = scmp.ne.s32.totalorder %s202, %s205
      %p214 = scmp.eq.s32.totalorder %s24, 1
      %p215 = por %p213, %p214
      %p216 = scmp.ne.s32.totalorder %s205, %s206
      %p217 = scmp.eq.s32.totalorder %s24, 0
      %p218 = por %p216, %p217
      %p219 = scmp.ne.s32.totalorder %s205, %s206
      %p220 = scmp.eq.s32.totalorder %s25, 1
      %p221 = por %p219, %p220
      %p223 = scmp.ne.s32.totalorder %s206, %s222
      %p224 = scmp.eq.s32.totalorder %s25, 0
      %p225 = por %p223, %p224
      %p226 = scmp.le.s32.totalorder 1, %s19
      %p227 = scmp.lt.s32.totalorder %s19, 3
      %p228 = pnand %p226, %p227
      %p229 = pneg %p228
      // Predicated region
      $region9: #{tpu_custom_call.1} parent=5 // pred_check
        _
      $region10: #{tpu_custom_call.1} parent=5 // pred_check_branch
        %231 = sbr.rel (%p228) target = $region12
      $region11: #{tpu_custom_call.1} parent=5 // pred_region
        %s232 = ssub.s32 %s19, 1
        // Predicated region
        $region13: #{tpu_custom_call.1} parent=11 // pred_check
          %p233 = pneg %p66
        $region14: #{tpu_custom_call.1} parent=11 // pred_check_branch
          %235 = sbr.rel (%p233) target = $region16
        $region15: #{tpu_custom_call.1} parent=11 // pred_region
          _
        $region16: #{tpu_custom_call.1} parent=11 // pred_fallthru
          _
        // Predicated region
        $region17: #{tpu_custom_call.1} parent=11 // pred_check
          %p236 = pneg %p87
        $region18: #{tpu_custom_call.1} parent=11 // pred_check_branch
          %238 = sbr.rel (%p236) target = $region20
        $region19: #{tpu_custom_call.1} parent=11 // pred_region
          %240 = vsyncadd [#allocation3], 0
          %s241 = sshll.u32 %s2, 4
          %s242 = int_to_ptr.hbm [resolvable:$true] %s241
          %s243 = sshll.u32 [#allocation2], 4
          %s244 = int_to_ptr.vmem [resolvable:$true] %s243
          %249 = dma.hbm_to_vmem [thread:$0]  %s242, 1024, %s244, [#allocation3], 64, 64, 4
        $region20: #{tpu_custom_call.1} parent=11 // pred_fallthru
          _
        // Predicated region
        $region21: #{tpu_custom_call.1} parent=11 // pred_check
          %p250 = pneg %p108
        $region22: #{tpu_custom_call.1} parent=11 // pred_check_branch
          %252 = sbr.rel (%p250) target = $region24
        $region23: #{tpu_custom_call.1} parent=11 // pred_region
          _
        $region24: #{tpu_custom_call.1} parent=11 // pred_fallthru
          _
        // Predicated region
        $region25: #{tpu_custom_call.1} parent=11 // pred_check
          %p253 = pneg %p129
        $region26: #{tpu_custom_call.1} parent=11 // pred_check_branch
          %255 = sbr.rel (%p253) target = $region28
        $region27: #{tpu_custom_call.1} parent=11 // pred_region
          _
        $region28: #{tpu_custom_call.1} parent=11 // pred_fallthru
          _
        // Predicated region
        $region29: #{tpu_custom_call.1} parent=11 // pred_check
          %p256 = pneg %p150
        $region30: #{tpu_custom_call.1} parent=11 // pred_check_branch
          %258 = sbr.rel (%p256) target = $region32
        $region31: #{tpu_custom_call.1} parent=11 // pred_region
          _
        $region32: #{tpu_custom_call.1} parent=11 // pred_fallthru
          _
        // Predicated region
        $region33: #{tpu_custom_call.1} parent=11 // pred_check
          %p259 = pneg %p171
        $region34: #{tpu_custom_call.1} parent=11 // pred_check_branch
          %261 = sbr.rel (%p259) target = $region36
        $region35: #{tpu_custom_call.1} parent=11 // pred_region
          %263 = vsyncadd [#allocation6], 0
          %s264 = sshll.u32 %s6, 4
          %s265 = int_to_ptr.hbm [resolvable:$true] %s264
          %s266 = sshll.u32 [#allocation5], 4
          %s267 = int_to_ptr.vmem [resolvable:$true] %s266
          %272 = dma.hbm_to_vmem [thread:$0]  %s265, 8192, %s267, [#allocation6], 512, 512, 32
        $region36: #{tpu_custom_call.1} parent=11 // pred_fallthru
          _
        // Predicated region
        $region37: #{tpu_custom_call.1} parent=11 // pred_check
          %p273 = pneg %p192
        $region38: #{tpu_custom_call.1} parent=11 // pred_check_branch
          %275 = sbr.rel (%p273) target = $region40
        $region39: #{tpu_custom_call.1} parent=11 // pred_region
          %277 = vsyncadd [#allocation6], 0
          %s278 = sshll.u32 %s7, 4
          %s279 = int_to_ptr.hbm [resolvable:$true] %s278
          %s280 = sshll.u32 [#allocation7], 4
          %s281 = int_to_ptr.vmem [resolvable:$true] %s280
          %286 = dma.hbm_to_vmem [thread:$0]  %s279, 4096, %s281, [#allocation6], 64, 64, 4
        $region40: #{tpu_custom_call.1} parent=11 // pred_fallthru
          _
      $region12: #{tpu_custom_call.1} parent=5 // pred_fallthru
        _
      %p287 = scmp.lt.s32.totalorder %s19, 2
      // Predicated region
      $region41: #{tpu_custom_call.1} parent=5 // pred_check
        %p288 = pneg %p287
      $region42: #{tpu_custom_call.1} parent=5 // pred_check_branch
        %290 = sbr.rel (%p288) target = $region44
      $region43: #{tpu_custom_call.1} parent=5 // pred_region
        // Predicated region
        $region45: #{tpu_custom_call.1} parent=43 // pred_check
          %p291 = pneg %p39
        $region46: #{tpu_custom_call.1} parent=43 // pred_check_branch
          %293 = sbr.rel (%p291) target = $region48
        $region47: #{tpu_custom_call.1} parent=43 // pred_region
          %p294 = scmp.lt.s32.totalorder %s19, 1
          %s295 = scalar_select %p294, %s19, 1
          %s296 = smul.addr %s295, 8
          %s297 = scalar_lea.vmem %s0, %s296
        $region48: #{tpu_custom_call.1} parent=43 // pred_fallthru
          _
      $region44: #{tpu_custom_call.1} parent=5 // pred_fallthru
        _
      %p298 = scmp.le.s32.totalorder 1, %s19
      %p299 = scmp.lt.s32.totalorder %s19, 3
      %p300 = pnand %p298, %p299
      %p301 = pneg %p300
      // Predicated region
      $region49: #{tpu_custom_call.1} parent=5 // pred_check
        _
      $region50: #{tpu_custom_call.1} parent=5 // pred_check_branch
        %303 = sbr.rel (%p300) target = $region52
      $region51: #{tpu_custom_call.1} parent=5 // pred_region
        %s304 = ssub.s32 %s19, 1
        // Predicated region
        $region53: #{tpu_custom_call.1} parent=51 // pred_check
          %p305 = pneg %p87
        $region54: #{tpu_custom_call.1} parent=51 // pred_check_branch
          %307 = sbr.rel (%p305) target = $region56
        $region55: #{tpu_custom_call.1} parent=51 // pred_region
          %309 = dma.done [#allocation3], 1024
        $region56: #{tpu_custom_call.1} parent=51 // pred_fallthru
          _
        // Predicated region
        $region57: #{tpu_custom_call.1} parent=51 // pred_check
          %p310 = pneg %p171
        $region58: #{tpu_custom_call.1} parent=51 // pred_check_branch
          %312 = sbr.rel (%p310) target = $region60
        $region59: #{tpu_custom_call.1} parent=51 // pred_region
          %314 = dma.done [#allocation6], 8192
        $region60: #{tpu_custom_call.1} parent=51 // pred_fallthru
          _
        // Predicated region
        $region61: #{tpu_custom_call.1} parent=51 // pred_check
          %p315 = pneg %p192
        $region62: #{tpu_custom_call.1} parent=51 // pred_check_branch
          %317 = sbr.rel (%p315) target = $region64
        $region63: #{tpu_custom_call.1} parent=51 // pred_region
          %319 = dma.done [#allocation6], 4096
        $region64: #{tpu_custom_call.1} parent=51 // pred_fallthru
          _
        %p320 = scmp.lt.s32.totalorder %s24, 1
        %s321 = scalar_select %p320, %s24, 1
        %s322 = smul.addr %s321, 8
        %s323 = scalar_lea.vmem %s0, %s322
        %p324 = pneg %p45
        %p325 = pneg %p42
        %p326 = pneg %p66
        %p327 = pneg %p63
        %p328 = pneg %p87
        %p329 = pneg %p84
        %p330 = pneg %p108
        %p331 = pneg %p105
        %p332 = pneg %p129
        %p333 = pneg %p126
        %p334 = pneg %p150
        %p335 = pneg %p147
        %p336 = pneg %p171
        %p337 = pneg %p168
        %p338 = pneg %p192
        %p339 = pneg %p189
        %p340 = pneg %p218
        %p341 = pneg %p215
        %s342 = sand.u32 %s205, 1
        %s343 = scalar_lea.sflag [#allocation4], %s342
        %s344 = sand.u32 %s205, 1
        %s345 = smul.addr %s344, 8
        %s346 = scalar_lea.vmem [#allocation8], %s345
        %p347 = scmp.lt.s32.totalorder %s24, 1
        %s348 = scalar_select %p347, %s24, 1
        %s349 = smul.addr %s348, 8
        %s350 = scalar_lea.vmem %s0, %s349
        %v352 = vld [vmem:[%s350] sm:$0xff]
        %v353 = vld [vmem:[%s1] sm:$0x1]
        %v354 = vmul.f32 %v352, %v352
        %355 = vadd.xlane.f32.xlu0 %v354
        %v356 = vpop.xlane.xlu0 %355
        %v357 = vrcp.pop 128.0
        %v358 = vmul.f32 128.0, %v357
        %v359 = vsub.f32 1.0, %v358
        %v360 = vmul.f32 %v357, %v359
        %v361 = vadd.f32 %v357, %v360
        %vm362 = vweird.f32 %v357
        %v363 = vsel %vm362, %v357, %v361
        %v364 = vmul.f32 %v356, %v363
        %v365 = vadd.f32 %v364, 1.1920929e-07
        %v366 = vrsqrt.pop %v365
        %v367 = vmul.f32 %v366, %v365
        %v368 = vmul.f32 %v367, %v366
        %v369 = vmul.f32 0.5, %v368
        %v370 = vsub.f32 1.5, %v369
        %v371 = vmul.f32 %v366, %v370
        %vm372 = vweird.f32 %v365
        %vm373 = vweird.f32 %v366
        %vm374 = vmor %vm372, %vm373
        %v375 = vsel %vm374, %v366, %v371
        %v376 = vmul.f32 %v352, %v375
        %v378 = vperm.slane %v353, 0
        %v380 = vmul.f32 %v376, %v378
        %v381 = vpack.c.bf16 %v380, %v380
        %v382 = vld [vmem:[#allocation2] sm:$0xf]
        %v383 = vld [vmem:[#allocation2 + $0x4] sm:$0xf]
        %v384 = vld [vmem:[#allocation2 + $0x8] sm:$0xf]
        %v385 = vld [vmem:[#allocation2 + $0xc] sm:$0xf]
        %v386 = vld [vmem:[#allocation2 + $0x10] sm:$0xf]
        %v387 = vld [vmem:[#allocation2 + $0x14] sm:$0xf]
        %v388 = vld [vmem:[#allocation2 + $0x18] sm:$0xf]
        %v389 = vld [vmem:[#allocation2 + $0x1c] sm:$0xf]
        %v390 = vld [vmem:[#allocation2 + $0x20] sm:$0xf]
        %v391 = vld [vmem:[#allocation2 + $0x24] sm:$0xf]
        %v392 = vld [vmem:[#allocation2 + $0x28] sm:$0xf]
        %v393 = vld [vmem:[#allocation2 + $0x2c] sm:$0xf]
        %v394 = vld [vmem:[#allocation2 + $0x30] sm:$0xf]
        %v395 = vld [vmem:[#allocation2 + $0x34] sm:$0xf]
        %v396 = vld [vmem:[#allocation2 + $0x38] sm:$0xf]
        %v397 = vld [vmem:[#allocation2 + $0x3c] sm:$0xf]
        %v414 = vunpack.c.l.b16 %v382
        %v415 = vunpack.c.l.b16 %v383
        %v416 = vunpack.c.l.b16 %v384
        %v417 = vunpack.c.l.b16 %v385
        %v418 = vunpack.c.l.b16 %v386
        %v419 = vunpack.c.l.b16 %v387
        %v420 = vunpack.c.l.b16 %v388
        %v421 = vunpack.c.l.b16 %v389
        %v422 = vunpack.c.l.b16 %v390
        %v423 = vunpack.c.l.b16 %v391
        %v424 = vunpack.c.l.b16 %v392
        %v425 = vunpack.c.l.b16 %v393
        %v426 = vunpack.c.l.b16 %v394
        %v427 = vunpack.c.l.b16 %v395
        %v428 = vunpack.c.l.b16 %v396
        %v429 = vunpack.c.l.b16 %v397
        %v430 = vpack.c.b16 %v415, %v414
        %v431 = vpack.c.b16 %v417, %v416
        %v432 = vpack.c.b16 %v419, %v418
        %v433 = vpack.c.b16 %v421, %v420
        %v434 = vpack.c.b16 %v423, %v422
        %v435 = vpack.c.b16 %v425, %v424
        %v436 = vpack.c.b16 %v427, %v426
        %v437 = vpack.c.b16 %v429, %v428
        %446 = vmatpush.bf16.msra.mxu0 %v437
        %447 = vmatpush.bf16.msra.mxu0 %v436
        %448 = vmatpush.bf16.msra.mxu0 %v435
        %449 = vmatpush.bf16.msra.mxu0 %v434
        %450 = vmatpush.bf16.msra.mxu0 %v433
        %451 = vmatpush.bf16.msra.mxu0 %v432
        %452 = vmatpush.bf16.msra.mxu0 %v431
        %453 = vmatpush.bf16.msra.mxu0 %v430
        %454 = vmatmul.bf16.gmra.mxu0 %v381
        %v455 = vpop.f32.mrf.mxu0
        %v456 = vadd.f32 0.0, %v455
        %v457 = vpop.f32.mrf.mxu0
        %458 = vdwg.mxu0
        %v459 = vld [vmem:[%s3] sm:$0xf]
        %v460 = vld [vmem:[%s3 + $0x4] sm:$0xf]
        %v461 = vld [vmem:[%s3 + $0x8] sm:$0xf]
        %v462 = vld [vmem:[%s3 + $0xc] sm:$0xf]
        %v463 = vld [vmem:[%s3 + $0x10] sm:$0xf]
        %v464 = vld [vmem:[%s3 + $0x14] sm:$0xf]
        %v465 = vld [vmem:[%s3 + $0x18] sm:$0xf]
        %v466 = vld [vmem:[%s3 + $0x1c] sm:$0xf]
        %v467 = vld [vmem:[%s4] sm:$0xff]
        %v468 = vpack.c.bf16 %v456, %v456
        %v477 = vunpack.c.l.b16 %v459
        %v478 = vunpack.c.l.b16 %v460
        %v479 = vunpack.c.l.b16 %v461
        %v480 = vunpack.c.l.b16 %v462
        %v481 = vunpack.c.l.b16 %v463
        %v482 = vunpack.c.l.b16 %v464
        %v483 = vunpack.c.l.b16 %v465
        %v484 = vunpack.c.l.b16 %v466
        %v485 = vpack.c.b16 %v478, %v477
        %v486 = vpack.c.b16 %v480, %v479
        %v487 = vpack.c.b16 %v482, %v481
        %v488 = vpack.c.b16 %v484, %v483
        %vm489 = vcmask 64512
        %v491 = vsel %vm489, %v485, 0
        %v494 = vsel %vm489, %v486, 0
        %v497 = vsel %vm489, %v487, 0
        %v500 = vsel %vm489, %v488, 0
        %vm502 = vcmask 1043456
        %v504 = vsel %vm502, %v468, 0
        %506 = vmatpush.bf16.msra.mxu0 0
        %507 = vmatpush.bf16.msra.mxu0 0
        %508 = vmatpush.bf16.msra.mxu0 0
        %509 = vmatpush.bf16.msra.mxu0 0
        %510 = vmatpush.bf16.msra.mxu0 0
        %511 = vmatpush.bf16.msra.mxu0 0
        %512 = vmatpush.bf16.msra.mxu0 0
        %513 = vmatpush.bf16.msra.mxu0 %v504
        %514 = vmatmul.bf16.gmra.mxu0 %v491
        %v515 = vpop.f32.mrf.mxu0
        %v516 = vadd.f32 0.0, %v515
        %v517 = vpop.f32.mrf.mxu0
        %v518 = vadd.f32 0.0, %v517
        %519 = vmatmul.bf16.gmra.mxu0 %v494
        %v520 = vpop.f32.mrf.mxu0
        %v521 = vadd.f32 0.0, %v520
        %v522 = vpop.f32.mrf.mxu0
        %v523 = vadd.f32 0.0, %v522
        %524 = vmatmul.bf16.gmra.mxu0 %v497
        %v525 = vpop.f32.mrf.mxu0
        %v526 = vadd.f32 0.0, %v525
        %v527 = vpop.f32.mrf.mxu0
        %v528 = vadd.f32 0.0, %v527
        %529 = vmatmul.bf16.gmra.mxu0 %v500
        %v530 = vpop.f32.mrf.mxu0
        %v531 = vadd.f32 0.0, %v530
        %v532 = vpop.f32.mrf.mxu0
        %v533 = vadd.f32 0.0, %v532
        %534 = vdwg.mxu0
        %v536 = vrot.slane %v467, 1
        %v537 = vrot.slane %v467, 2
        %v538 = vrot.slane %v467, 3
        %v539 = vrot.slane %v467, 4
        %v540 = vrot.slane %v467, 5
        %v541 = vrot.slane %v467, 6
        %v542 = vrot.slane %v467, 7
        %v543 = vperm.slane %v467, 0
        %v544 = vperm.slane %v536, 0
        %v545 = vperm.slane %v537, 0
        %v546 = vperm.slane %v538, 0
        %v547 = vperm.slane %v539, 0
        %v548 = vperm.slane %v540, 0
        %v549 = vperm.slane %v541, 0
        %v550 = vperm.slane %v542, 0
        %v559 = vmul.f32 %v516, %v543
        %v560 = vmul.f32 %v518, %v544
        %v561 = vmul.f32 %v521, %v545
        %v562 = vmul.f32 %v523, %v546
        %v563 = vmul.f32 %v526, %v547
        %v564 = vmul.f32 %v528, %v548
        %v565 = vmul.f32 %v531, %v549
        %v566 = vmul.f32 %v533, %v550
        %v567 = vadd.f32 %v559, %v560
        %v568 = vadd.f32 %v567, %v561
        %v569 = vadd.f32 %v568, %v562
        %v570 = vadd.f32 %v569, %v563
        %v571 = vadd.f32 %v570, %v564
        %v572 = vadd.f32 %v571, %v565
        %v573 = vadd.f32 %v572, %v566
        %v574 = vadd.f32 %v352, %v573
        %v575 = vld [vmem:[%s5] sm:$0x1]
        %v576 = vmul.f32 %v574, %v574
        %577 = vadd.xlane.f32.xlu0 %v576
        %v578 = vpop.xlane.xlu0 %577
        %v579 = vmul.f32 %v578, %v363
        %v580 = vadd.f32 %v579, 1.1920929e-07
        %v581 = vrsqrt.pop %v580
        %v582 = vmul.f32 %v581, %v580
        %v583 = vmul.f32 %v582, %v581
        %v584 = vmul.f32 0.5, %v583
        %v585 = vsub.f32 1.5, %v584
        %v586 = vmul.f32 %v581, %v585
        %vm587 = vweird.f32 %v580
        %vm588 = vweird.f32 %v581
        %vm589 = vmor %vm587, %vm588
        %v590 = vsel %vm589, %v581, %v586
        %v591 = vmul.f32 %v574, %v590
        %v593 = vperm.slane %v575, 0
        %v595 = vmul.f32 %v591, %v593
        %v596 = vpack.c.bf16 %v595, %v595
        %v597 = vld [vmem:[#allocation5] sm:$0xff]
        %v598 = vld [vmem:[#allocation5 + $0x8] sm:$0xff]
        %v599 = vld [vmem:[#allocation5 + $0x10] sm:$0xff]
        %v600 = vld [vmem:[#allocation5 + $0x18] sm:$0xff]
        %v601 = vld [vmem:[#allocation5 + $0x20] sm:$0xff]
        %v602 = vld [vmem:[#allocation5 + $0x28] sm:$0xff]
        %v603 = vld [vmem:[#allocation5 + $0x30] sm:$0xff]
        %v604 = vld [vmem:[#allocation5 + $0x38] sm:$0xff]
        %v605 = vld [vmem:[#allocation5 + $0x40] sm:$0xff]
        %v606 = vld [vmem:[#allocation5 + $0x48] sm:$0xff]
        %v607 = vld [vmem:[#allocation5 + $0x50] sm:$0xff]
        %v608 = vld [vmem:[#allocation5 + $0x58] sm:$0xff]
        %v609 = vld [vmem:[#allocation5 + $0x60] sm:$0xff]
        %v610 = vld [vmem:[#allocation5 + $0x68] sm:$0xff]
        %v611 = vld [vmem:[#allocation5 + $0x70] sm:$0xff]
        %v612 = vld [vmem:[#allocation5 + $0x78] sm:$0xff]
        %v613 = vld [vmem:[#allocation5 + $0x80] sm:$0xff]
        %v614 = vld [vmem:[#allocation5 + $0x88] sm:$0xff]
        %v615 = vld [vmem:[#allocation5 + $0x90] sm:$0xff]
        %v616 = vld [vmem:[#allocation5 + $0x98] sm:$0xff]
        %v617 = vld [vmem:[#allocation5 + $0xa0] sm:$0xff]
        %v618 = vld [vmem:[#allocation5 + $0xa8] sm:$0xff]
        %v619 = vld [vmem:[#allocation5 + $0xb0] sm:$0xff]
        %v620 = vld [vmem:[#allocation5 + $0xb8] sm:$0xff]
        %v621 = vld [vmem:[#allocation5 + $0xc0] sm:$0xff]
        %v622 = vld [vmem:[#allocation5 + $0xc8] sm:$0xff]
        %v623 = vld [vmem:[#allocation5 + $0xd0] sm:$0xff]
        %v624 = vld [vmem:[#allocation5 + $0xd8] sm:$0xff]
        %v625 = vld [vmem:[#allocation5 + $0xe0] sm:$0xff]
        %v626 = vld [vmem:[#allocation5 + $0xe8] sm:$0xff]
        %v627 = vld [vmem:[#allocation5 + $0xf0] sm:$0xff]
        %v628 = vld [vmem:[#allocation5 + $0xf8] sm:$0xff]
        %v629 = vld [vmem:[#allocation5 + $0x100] sm:$0xff]
        %v630 = vld [vmem:[#allocation5 + $0x108] sm:$0xff]
        %v631 = vld [vmem:[#allocation5 + $0x110] sm:$0xff]
        %v632 = vld [vmem:[#allocation5 + $0x118] sm:$0xff]
        %v633 = vld [vmem:[#allocation5 + $0x120] sm:$0xff]
        %v634 = vld [vmem:[#allocation5 + $0x128] sm:$0xff]
        %v635 = vld [vmem:[#allocation5 + $0x130] sm:$0xff]
        %v636 = vld [vmem:[#allocation5 + $0x138] sm:$0xff]
        %v637 = vld [vmem:[#allocation5 + $0x140] sm:$0xff]
        %v638 = vld [vmem:[#allocation5 + $0x148] sm:$0xff]
        %v639 = vld [vmem:[#allocation5 + $0x150] sm:$0xff]
        %v640 = vld [vmem:[#allocation5 + $0x158] sm:$0xff]
        %v641 = vld [vmem:[#allocation5 + $0x160] sm:$0xff]
        %v642 = vld [vmem:[#allocation5 + $0x168] sm:$0xff]
        %v643 = vld [vmem:[#allocation5 + $0x170] sm:$0xff]
        %v644 = vld [vmem:[#allocation5 + $0x178] sm:$0xff]
        %v645 = vld [vmem:[#allocation5 + $0x180] sm:$0xff]
        %v646 = vld [vmem:[#allocation5 + $0x188] sm:$0xff]
        %v647 = vld [vmem:[#allocation5 + $0x190] sm:$0xff]
        %v648 = vld [vmem:[#allocation5 + $0x198] sm:$0xff]
        %v649 = vld [vmem:[#allocation5 + $0x1a0] sm:$0xff]
        %v650 = vld [vmem:[#allocation5 + $0x1a8] sm:$0xff]
        %v651 = vld [vmem:[#allocation5 + $0x1b0] sm:$0xff]
        %v652 = vld [vmem:[#allocation5 + $0x1b8] sm:$0xff]
        %v653 = vld [vmem:[#allocation5 + $0x1c0] sm:$0xff]
        %v654 = vld [vmem:[#allocation5 + $0x1c8] sm:$0xff]
        %v655 = vld [vmem:[#allocation5 + $0x1d0] sm:$0xff]
        %v656 = vld [vmem:[#allocation5 + $0x1d8] sm:$0xff]
        %v657 = vld [vmem:[#allocation5 + $0x1e0] sm:$0xff]
        %v658 = vld [vmem:[#allocation5 + $0x1e8] sm:$0xff]
        %v659 = vld [vmem:[#allocation5 + $0x1f0] sm:$0xff]
        %v660 = vld [vmem:[#allocation5 + $0x1f8] sm:$0xff]
        %v725 = vunpack.c.l.b16 %v597
        %v726 = vunpack.c.h.b16 %v597
        %v727 = vunpack.c.l.b16 %v598
        %v728 = vunpack.c.h.b16 %v598
        %v729 = vunpack.c.l.b16 %v599
        %v730 = vunpack.c.h.b16 %v599
        %v731 = vunpack.c.l.b16 %v600
        %v732 = vunpack.c.h.b16 %v600
        %v733 = vunpack.c.l.b16 %v601
        %v734 = vunpack.c.h.b16 %v601
        %v735 = vunpack.c.l.b16 %v602
        %v736 = vunpack.c.h.b16 %v602
        %v737 = vunpack.c.l.b16 %v603
        %v738 = vunpack.c.h.b16 %v603
        %v739 = vunpack.c.l.b16 %v604
        %v740 = vunpack.c.h.b16 %v604
        %v741 = vunpack.c.l.b16 %v605
        %v742 = vunpack.c.h.b16 %v605
        %v743 = vunpack.c.l.b16 %v606
        %v744 = vunpack.c.h.b16 %v606
        %v745 = vunpack.c.l.b16 %v607
        %v746 = vunpack.c.h.b16 %v607
        %v747 = vunpack.c.l.b16 %v608
        %v748 = vunpack.c.h.b16 %v608
        %v749 = vunpack.c.l.b16 %v609
        %v750 = vunpack.c.h.b16 %v609
        %v751 = vunpack.c.l.b16 %v610
        %v752 = vunpack.c.h.b16 %v610
        %v753 = vunpack.c.l.b16 %v611
        %v754 = vunpack.c.h.b16 %v611
        %v755 = vunpack.c.l.b16 %v612
        %v756 = vunpack.c.h.b16 %v612
        %v757 = vunpack.c.l.b16 %v613
        %v758 = vunpack.c.h.b16 %v613
        %v759 = vunpack.c.l.b16 %v614
        %v760 = vunpack.c.h.b16 %v614
        %v761 = vunpack.c.l.b16 %v615
        %v762 = vunpack.c.h.b16 %v615
        %v763 = vunpack.c.l.b16 %v616
        %v764 = vunpack.c.h.b16 %v616
        %v765 = vunpack.c.l.b16 %v617
        %v766 = vunpack.c.h.b16 %v617
        %v767 = vunpack.c.l.b16 %v618
        %v768 = vunpack.c.h.b16 %v618
        %v769 = vunpack.c.l.b16 %v619
        %v770 = vunpack.c.h.b16 %v619
        %v771 = vunpack.c.l.b16 %v620
        %v772 = vunpack.c.h.b16 %v620
        %v773 = vunpack.c.l.b16 %v621
        %v774 = vunpack.c.h.b16 %v621
        %v775 = vunpack.c.l.b16 %v622
        %v776 = vunpack.c.h.b16 %v622
        %v777 = vunpack.c.l.b16 %v623
        %v778 = vunpack.c.h.b16 %v623
        %v779 = vunpack.c.l.b16 %v624
        %v780 = vunpack.c.h.b16 %v624
        %v781 = vunpack.c.l.b16 %v625
        %v782 = vunpack.c.h.b16 %v625
        %v783 = vunpack.c.l.b16 %v626
        %v784 = vunpack.c.h.b16 %v626
        %v785 = vunpack.c.l.b16 %v627
        %v786 = vunpack.c.h.b16 %v627
        %v787 = vunpack.c.l.b16 %v628
        %v788 = vunpack.c.h.b16 %v628
        %v789 = vunpack.c.l.b16 %v629
        %v790 = vunpack.c.h.b16 %v629
        %v791 = vunpack.c.l.b16 %v630
        %v792 = vunpack.c.h.b16 %v630
        %v793 = vunpack.c.l.b16 %v631
        %v794 = vunpack.c.h.b16 %v631
        %v795 = vunpack.c.l.b16 %v632
        %v796 = vunpack.c.h.b16 %v632
        %v797 = vunpack.c.l.b16 %v633
        %v798 = vunpack.c.h.b16 %v633
        %v799 = vunpack.c.l.b16 %v634
        %v800 = vunpack.c.h.b16 %v634
        %v801 = vunpack.c.l.b16 %v635
        %v802 = vunpack.c.h.b16 %v635
        %v803 = vunpack.c.l.b16 %v636
        %v804 = vunpack.c.h.b16 %v636
        %v805 = vunpack.c.l.b16 %v637
        %v806 = vunpack.c.h.b16 %v637
        %v807 = vunpack.c.l.b16 %v638
        %v808 = vunpack.c.h.b16 %v638
        %v809 = vunpack.c.l.b16 %v639
        %v810 = vunpack.c.h.b16 %v639
        %v811 = vunpack.c.l.b16 %v640
        %v812 = vunpack.c.h.b16 %v640
        %v813 = vunpack.c.l.b16 %v641
        %v814 = vunpack.c.h.b16 %v641
        %v815 = vunpack.c.l.b16 %v642
        %v816 = vunpack.c.h.b16 %v642
        %v817 = vunpack.c.l.b16 %v643
        %v818 = vunpack.c.h.b16 %v643
        %v819 = vunpack.c.l.b16 %v644
        %v820 = vunpack.c.h.b16 %v644
        %v821 = vunpack.c.l.b16 %v645
        %v822 = vunpack.c.h.b16 %v645
        %v823 = vunpack.c.l.b16 %v646
        %v824 = vunpack.c.h.b16 %v646
        %v825 = vunpack.c.l.b16 %v647
        %v826 = vunpack.c.h.b16 %v647
        %v827 = vunpack.c.l.b16 %v648
        %v828 = vunpack.c.h.b16 %v648
        %v829 = vunpack.c.l.b16 %v649
        %v830 = vunpack.c.h.b16 %v649
        %v831 = vunpack.c.l.b16 %v650
        %v832 = vunpack.c.h.b16 %v650
        %v833 = vunpack.c.l.b16 %v651
        %v834 = vunpack.c.h.b16 %v651
        %v835 = vunpack.c.l.b16 %v652
        %v836 = vunpack.c.h.b16 %v652
        %v837 = vunpack.c.l.b16 %v653
        %v838 = vunpack.c.h.b16 %v653
        %v839 = vunpack.c.l.b16 %v654
        %v840 = vunpack.c.h.b16 %v654
        %v841 = vunpack.c.l.b16 %v655
        %v842 = vunpack.c.h.b16 %v655
        %v843 = vunpack.c.l.b16 %v656
        %v844 = vunpack.c.h.b16 %v656
        %v845 = vunpack.c.l.b16 %v657
        %v846 = vunpack.c.h.b16 %v657
        %v847 = vunpack.c.l.b16 %v658
        %v848 = vunpack.c.h.b16 %v658
        %v849 = vunpack.c.l.b16 %v659
        %v850 = vunpack.c.h.b16 %v659
        %v851 = vunpack.c.l.b16 %v660
        %v852 = vunpack.c.h.b16 %v660
        %v853 = vpack.c.b16 %v733, %v725
        %v854 = vpack.c.b16 %v734, %v726
        %v855 = vpack.c.b16 %v735, %v727
        %v856 = vpack.c.b16 %v736, %v728
        %v857 = vpack.c.b16 %v737, %v729
        %v858 = vpack.c.b16 %v738, %v730
        %v859 = vpack.c.b16 %v739, %v731
        %v860 = vpack.c.b16 %v740, %v732
        %v861 = vpack.c.b16 %v749, %v741
        %v862 = vpack.c.b16 %v750, %v742
        %v863 = vpack.c.b16 %v751, %v743
        %v864 = vpack.c.b16 %v752, %v744
        %v865 = vpack.c.b16 %v753, %v745
        %v866 = vpack.c.b16 %v754, %v746
        %v867 = vpack.c.b16 %v755, %v747
        %v868 = vpack.c.b16 %v756, %v748
        %v869 = vpack.c.b16 %v765, %v757
        %v870 = vpack.c.b16 %v766, %v758
        %v871 = vpack.c.b16 %v767, %v759
        %v872 = vpack.c.b16 %v768, %v760
        %v873 = vpack.c.b16 %v769, %v761
        %v874 = vpack.c.b16 %v770, %v762
        %v875 = vpack.c.b16 %v771, %v763
        %v876 = vpack.c.b16 %v772, %v764
        %v877 = vpack.c.b16 %v781, %v773
        %v878 = vpack.c.b16 %v782, %v774
        %v879 = vpack.c.b16 %v783, %v775
        %v880 = vpack.c.b16 %v784, %v776
        %v881 = vpack.c.b16 %v785, %v777
        %v882 = vpack.c.b16 %v786, %v778
        %v883 = vpack.c.b16 %v787, %v779
        %v884 = vpack.c.b16 %v788, %v780
        %v885 = vpack.c.b16 %v797, %v789
        %v886 = vpack.c.b16 %v798, %v790
        %v887 = vpack.c.b16 %v799, %v791
        %v888 = vpack.c.b16 %v800, %v792
        %v889 = vpack.c.b16 %v801, %v793
        %v890 = vpack.c.b16 %v802, %v794
        %v891 = vpack.c.b16 %v803, %v795
        %v892 = vpack.c.b16 %v804, %v796
        %v893 = vpack.c.b16 %v813, %v805
        %v894 = vpack.c.b16 %v814, %v806
        %v895 = vpack.c.b16 %v815, %v807
        %v896 = vpack.c.b16 %v816, %v808
        %v897 = vpack.c.b16 %v817, %v809
        %v898 = vpack.c.b16 %v818, %v810
        %v899 = vpack.c.b16 %v819, %v811
        %v900 = vpack.c.b16 %v820, %v812
        %v901 = vpack.c.b16 %v829, %v821
        %v902 = vpack.c.b16 %v830, %v822
        %v903 = vpack.c.b16 %v831, %v823
        %v904 = vpack.c.b16 %v832, %v824
        %v905 = vpack.c.b16 %v833, %v825
        %v906 = vpack.c.b16 %v834, %v826
        %v907 = vpack.c.b16 %v835, %v827
        %v908 = vpack.c.b16 %v836, %v828
        %v909 = vpack.c.b16 %v845, %v837
        %v910 = vpack.c.b16 %v846, %v838
        %v911 = vpack.c.b16 %v847, %v839
        %v912 = vpack.c.b16 %v848, %v840
        %v913 = vpack.c.b16 %v849, %v841
        %v914 = vpack.c.b16 %v850, %v842
        %v915 = vpack.c.b16 %v851, %v843
        %v916 = vpack.c.b16 %v852, %v844
        %981 = vmatpush.bf16.msra.mxu0 %v909
        %982 = vmatpush.bf16.msra.mxu0 %v901
        %983 = vmatpush.bf16.msra.mxu0 %v893
        %984 = vmatpush.bf16.msra.mxu0 %v885
        %985 = vmatpush.bf16.msra.mxu0 %v877
        %986 = vmatpush.bf16.msra.mxu0 %v869
        %987 = vmatpush.bf16.msra.mxu0 %v861
        %988 = vmatpush.bf16.msra.mxu0 %v853
        %989 = vmatmul.bf16.gmra.mxu0 %v596
        %v990 = vpop.f32.mrf.mxu0
        %v991 = vadd.f32 0.0, %v990
        %v992 = vpop.f32.mrf.mxu0
        %993 = vdwg.mxu0
        %994 = vmatpush.bf16.msra.mxu0 %v910
        %995 = vmatpush.bf16.msra.mxu0 %v902
        %996 = vmatpush.bf16.msra.mxu0 %v894
        %997 = vmatpush.bf16.msra.mxu0 %v886
        %998 = vmatpush.bf16.msra.mxu0 %v878
        %999 = vmatpush.bf16.msra.mxu0 %v870
        %1000 = vmatpush.bf16.msra.mxu0 %v862
        %1001 = vmatpush.bf16.msra.mxu0 %v854
        %1002 = vmatmul.bf16.gmra.mxu0 %v596
        %v1003 = vpop.f32.mrf.mxu0
        %v1004 = vadd.f32 0.0, %v1003
        %v1005 = vpop.f32.mrf.mxu0
        %1006 = vdwg.mxu0
        %1007 = vmatpush.bf16.msra.mxu0 %v911
        %1008 = vmatpush.bf16.msra.mxu0 %v903
        %1009 = vmatpush.bf16.msra.mxu0 %v895
        %1010 = vmatpush.bf16.msra.mxu0 %v887
        %1011 = vmatpush.bf16.msra.mxu0 %v879
        %1012 = vmatpush.bf16.msra.mxu0 %v871
        %1013 = vmatpush.bf16.msra.mxu0 %v863
        %1014 = vmatpush.bf16.msra.mxu0 %v855
        %1015 = vmatmul.bf16.gmra.mxu0 %v596
        %v1016 = vpop.f32.mrf.mxu0
        %v1017 = vadd.f32 0.0, %v1016
        %v1018 = vpop.f32.mrf.mxu0
        %1019 = vdwg.mxu0
        %1020 = vmatpush.bf16.msra.mxu0 %v912
        %1021 = vmatpush.bf16.msra.mxu0 %v904
        %1022 = vmatpush.bf16.msra.mxu0 %v896
        %1023 = vmatpush.bf16.msra.mxu0 %v888
        %1024 = vmatpush.bf16.msra.mxu0 %v880
        %1025 = vmatpush.bf16.msra.mxu0 %v872
        %1026 = vmatpush.bf16.msra.mxu0 %v864
        %1027 = vmatpush.bf16.msra.mxu0 %v856
        %1028 = vmatmul.bf16.gmra.mxu0 %v596
        %v1029 = vpop.f32.mrf.mxu0
        %v1030 = vadd.f32 0.0, %v1029
        %v1031 = vpop.f32.mrf.mxu0
        %1032 = vdwg.mxu0
        %1033 = vmatpush.bf16.msra.mxu0 %v913
        %1034 = vmatpush.bf16.msra.mxu0 %v905
        %1035 = vmatpush.bf16.msra.mxu0 %v897
        %1036 = vmatpush.bf16.msra.mxu0 %v889
        %1037 = vmatpush.bf16.msra.mxu0 %v881
        %1038 = vmatpush.bf16.msra.mxu0 %v873
        %1039 = vmatpush.bf16.msra.mxu0 %v865
        %1040 = vmatpush.bf16.msra.mxu0 %v857
        %1041 = vmatmul.bf16.gmra.mxu0 %v596
        %v1042 = vpop.f32.mrf.mxu0
        %v1043 = vadd.f32 0.0, %v1042
        %v1044 = vpop.f32.mrf.mxu0
        %1045 = vdwg.mxu0
        %1046 = vmatpush.bf16.msra.mxu0 %v914
        %1047 = vmatpush.bf16.msra.mxu0 %v906
        %1048 = vmatpush.bf16.msra.mxu0 %v898
        %1049 = vmatpush.bf16.msra.mxu0 %v890
        %1050 = vmatpush.bf16.msra.mxu0 %v882
        %1051 = vmatpush.bf16.msra.mxu0 %v874
        %1052 = vmatpush.bf16.msra.mxu0 %v866
        %1053 = vmatpush.bf16.msra.mxu0 %v858
        %1054 = vmatmul.bf16.gmra.mxu0 %v596
        %v1055 = vpop.f32.mrf.mxu0
        %v1056 = vadd.f32 0.0, %v1055
        %v1057 = vpop.f32.mrf.mxu0
        %1058 = vdwg.mxu0
        %1059 = vmatpush.bf16.msra.mxu0 %v915
        %1060 = vmatpush.bf16.msra.mxu0 %v907
        %1061 = vmatpush.bf16.msra.mxu0 %v899
        %1062 = vmatpush.bf16.msra.mxu0 %v891
        %1063 = vmatpush.bf16.msra.mxu0 %v883
        %1064 = vmatpush.bf16.msra.mxu0 %v875
        %1065 = vmatpush.bf16.msra.mxu0 %v867
        %1066 = vmatpush.bf16.msra.mxu0 %v859
        %1067 = vmatmul.bf16.gmra.mxu0 %v596
        %v1068 = vpop.f32.mrf.mxu0
        %v1069 = vadd.f32 0.0, %v1068
        %v1070 = vpop.f32.mrf.mxu0
        %1071 = vdwg.mxu0
        %1072 = vmatpush.bf16.msra.mxu0 %v916
        %1073 = vmatpush.bf16.msra.mxu0 %v908
        %1074 = vmatpush.bf16.msra.mxu0 %v900
        %1075 = vmatpush.bf16.msra.mxu0 %v892
        %1076 = vmatpush.bf16.msra.mxu0 %v884
        %1077 = vmatpush.bf16.msra.mxu0 %v876
        %1078 = vmatpush.bf16.msra.mxu0 %v868
        %1079 = vmatpush.bf16.msra.mxu0 %v860
        %1080 = vmatmul.bf16.gmra.mxu0 %v596
        %v1081 = vpop.f32.mrf.mxu0
        %v1082 = vadd.f32 0.0, %v1081
        %v1083 = vpop.f32.mrf.mxu0
        %1084 = vdwg.mxu0
        %v1085 = vmul.f32 %v991, %v991
        %v1086 = vmul.f32 %v1004, %v1004
        %v1087 = vmul.f32 %v1017, %v1017
        %v1088 = vmul.f32 %v1030, %v1030
        %v1089 = vmul.f32 %v991, %v1085
        %v1090 = vmul.f32 %v1004, %v1086
        %v1091 = vmul.f32 %v1017, %v1087
        %v1092 = vmul.f32 %v1030, %v1088
        %v1093 = vmul.f32 %v1089, 0.044715
        %v1094 = vmul.f32 %v1090, 0.044715
        %v1095 = vmul.f32 %v1091, 0.044715
        %v1096 = vmul.f32 %v1092, 0.044715
        %v1097 = vadd.f32 %v991, %v1093
        %v1098 = vadd.f32 %v1004, %v1094
        %v1099 = vadd.f32 %v1017, %v1095
        %v1100 = vadd.f32 %v1030, %v1096
        %v1101 = vmul.f32 %v1097, 0.7978846
        %v1102 = vmul.f32 %v1098, 0.7978846
        %v1103 = vmul.f32 %v1099, 0.7978846
        %v1104 = vmul.f32 %v1100, 0.7978846
        %v1105 = vtanh.pop %v1101
        %v1106 = vtanh.pop %v1102
        %v1107 = vtanh.pop %v1103
        %v1108 = vtanh.pop %v1104
        %v1109 = vadd.f32 %v1105, 1.0
        %v1110 = vadd.f32 %v1106, 1.0
        %v1111 = vadd.f32 %v1107, 1.0
        %v1112 = vadd.f32 %v1108, 1.0
        %v1113 = vmul.f32 %v1109, 0.5
        %v1114 = vmul.f32 %v1110, 0.5
        %v1115 = vmul.f32 %v1111, 0.5
        %v1116 = vmul.f32 %v1112, 0.5
        %v1117 = vmul.f32 %v991, %v1113
        %v1118 = vmul.f32 %v1004, %v1114
        %v1119 = vmul.f32 %v1017, %v1115
        %v1120 = vmul.f32 %v1030, %v1116
        %v1121 = vmul.f32 %v1117, %v1043
        %v1122 = vmul.f32 %v1118, %v1056
        %v1123 = vmul.f32 %v1119, %v1069
        %v1124 = vmul.f32 %v1120, %v1082
        %v1125 = vpack.c.bf16 %v1121, %v1121
        %v1126 = vpack.c.bf16 %v1122, %v1122
        %v1127 = vpack.c.bf16 %v1123, %v1123
        %v1128 = vpack.c.bf16 %v1124, %v1124
        %v1129 = vld [vmem:[#allocation7] sm:$0xf]
        %v1130 = vld [vmem:[#allocation7 + $0x4] sm:$0xf]
        %v1131 = vld [vmem:[#allocation7 + $0x8] sm:$0xf]
        %v1132 = vld [vmem:[#allocation7 + $0xc] sm:$0xf]
        %v1133 = vld [vmem:[#allocation7 + $0x10] sm:$0xf]
        %v1134 = vld [vmem:[#allocation7 + $0x14] sm:$0xf]
        %v1135 = vld [vmem:[#allocation7 + $0x18] sm:$0xf]
        %v1136 = vld [vmem:[#allocation7 + $0x1c] sm:$0xf]
        %v1137 = vld [vmem:[#allocation7 + $0x20] sm:$0xf]
        %v1138 = vld [vmem:[#allocation7 + $0x24] sm:$0xf]
        %v1139 = vld [vmem:[#allocation7 + $0x28] sm:$0xf]
        %v1140 = vld [vmem:[#allocation7 + $0x2c] sm:$0xf]
        %v1141 = vld [vmem:[#allocation7 + $0x30] sm:$0xf]
        %v1142 = vld [vmem:[#allocation7 + $0x34] sm:$0xf]
        %v1143 = vld [vmem:[#allocation7 + $0x38] sm:$0xf]
        %v1144 = vld [vmem:[#allocation7 + $0x3c] sm:$0xf]
        %v1145 = vld [vmem:[#allocation7 + $0x40] sm:$0xf]
        %v1146 = vld [vmem:[#allocation7 + $0x44] sm:$0xf]
        %v1147 = vld [vmem:[#allocation7 + $0x48] sm:$0xf]
        %v1148 = vld [vmem:[#allocation7 + $0x4c] sm:$0xf]
        %v1149 = vld [vmem:[#allocation7 + $0x50] sm:$0xf]
        %v1150 = vld [vmem:[#allocation7 + $0x54] sm:$0xf]
        %v1151 = vld [vmem:[#allocation7 + $0x58] sm:$0xf]
        %v1152 = vld [vmem:[#allocation7 + $0x5c] sm:$0xf]
        %v1153 = vld [vmem:[#allocation7 + $0x60] sm:$0xf]
        %v1154 = vld [vmem:[#allocation7 + $0x64] sm:$0xf]
        %v1155 = vld [vmem:[#allocation7 + $0x68] sm:$0xf]
        %v1156 = vld [vmem:[#allocation7 + $0x6c] sm:$0xf]
        %v1157 = vld [vmem:[#allocation7 + $0x70] sm:$0xf]
        %v1158 = vld [vmem:[#allocation7 + $0x74] sm:$0xf]
        %v1159 = vld [vmem:[#allocation7 + $0x78] sm:$0xf]
        %v1160 = vld [vmem:[#allocation7 + $0x7c] sm:$0xf]
        %v1161 = vld [vmem:[#allocation7 + $0x80] sm:$0xf]
        %v1162 = vld [vmem:[#allocation7 + $0x84] sm:$0xf]
        %v1163 = vld [vmem:[#allocation7 + $0x88] sm:$0xf]
        %v1164 = vld [vmem:[#allocation7 + $0x8c] sm:$0xf]
        %v1165 = vld [vmem:[#allocation7 + $0x90] sm:$0xf]
        %v1166 = vld [vmem:[#allocation7 + $0x94] sm:$0xf]
        %v1167 = vld [vmem:[#allocation7 + $0x98] sm:$0xf]
        %v1168 = vld [vmem:[#allocation7 + $0x9c] sm:$0xf]
        %v1169 = vld [vmem:[#allocation7 + $0xa0] sm:$0xf]
        %v1170 = vld [vmem:[#allocation7 + $0xa4] sm:$0xf]
        %v1171 = vld [vmem:[#allocation7 + $0xa8] sm:$0xf]
        %v1172 = vld [vmem:[#allocation7 + $0xac] sm:$0xf]
        %v1173 = vld [vmem:[#allocation7 + $0xb0] sm:$0xf]
        %v1174 = vld [vmem:[#allocation7 + $0xb4] sm:$0xf]
        %v1175 = vld [vmem:[#allocation7 + $0xb8] sm:$0xf]
        %v1176 = vld [vmem:[#allocation7 + $0xbc] sm:$0xf]
        %v1177 = vld [vmem:[#allocation7 + $0xc0] sm:$0xf]
        %v1178 = vld [vmem:[#allocation7 + $0xc4] sm:$0xf]
        %v1179 = vld [vmem:[#allocation7 + $0xc8] sm:$0xf]
        %v1180 = vld [vmem:[#allocation7 + $0xcc] sm:$0xf]
        %v1181 = vld [vmem:[#allocation7 + $0xd0] sm:$0xf]
        %v1182 = vld [vmem:[#allocation7 + $0xd4] sm:$0xf]
        %v1183 = vld [vmem:[#allocation7 + $0xd8] sm:$0xf]
        %v1184 = vld [vmem:[#allocation7 + $0xdc] sm:$0xf]
        %v1185 = vld [vmem:[#allocation7 + $0xe0] sm:$0xf]
        %v1186 = vld [vmem:[#allocation7 + $0xe4] sm:$0xf]
        %v1187 = vld [vmem:[#allocation7 + $0xe8] sm:$0xf]
        %v1188 = vld [vmem:[#allocation7 + $0xec] sm:$0xf]
        %v1189 = vld [vmem:[#allocation7 + $0xf0] sm:$0xf]
        %v1190 = vld [vmem:[#allocation7 + $0xf4] sm:$0xf]
        %v1191 = vld [vmem:[#allocation7 + $0xf8] sm:$0xf]
        %v1192 = vld [vmem:[#allocation7 + $0xfc] sm:$0xf]
        %v1257 = vunpack.c.l.b16 %v1129
        %v1258 = vunpack.c.l.b16 %v1130
        %v1259 = vunpack.c.l.b16 %v1131
        %v1260 = vunpack.c.l.b16 %v1132
        %v1261 = vunpack.c.l.b16 %v1133
        %v1262 = vunpack.c.l.b16 %v1134
        %v1263 = vunpack.c.l.b16 %v1135
        %v1264 = vunpack.c.l.b16 %v1136
        %v1265 = vunpack.c.l.b16 %v1137
        %v1266 = vunpack.c.l.b16 %v1138
        %v1267 = vunpack.c.l.b16 %v1139
        %v1268 = vunpack.c.l.b16 %v1140
        %v1269 = vunpack.c.l.b16 %v1141
        %v1270 = vunpack.c.l.b16 %v1142
        %v1271 = vunpack.c.l.b16 %v1143
        %v1272 = vunpack.c.l.b16 %v1144
        %v1273 = vunpack.c.l.b16 %v1145
        %v1274 = vunpack.c.l.b16 %v1146
        %v1275 = vunpack.c.l.b16 %v1147
        %v1276 = vunpack.c.l.b16 %v1148
        %v1277 = vunpack.c.l.b16 %v1149
        %v1278 = vunpack.c.l.b16 %v1150
        %v1279 = vunpack.c.l.b16 %v1151
        %v1280 = vunpack.c.l.b16 %v1152
        %v1281 = vunpack.c.l.b16 %v1153
        %v1282 = vunpack.c.l.b16 %v1154
        %v1283 = vunpack.c.l.b16 %v1155
        %v1284 = vunpack.c.l.b16 %v1156
        %v1285 = vunpack.c.l.b16 %v1157
        %v1286 = vunpack.c.l.b16 %v1158
        %v1287 = vunpack.c.l.b16 %v1159
        %v1288 = vunpack.c.l.b16 %v1160
        %v1289 = vunpack.c.l.b16 %v1161
        %v1290 = vunpack.c.l.b16 %v1162
        %v1291 = vunpack.c.l.b16 %v1163
        %v1292 = vunpack.c.l.b16 %v1164
        %v1293 = vunpack.c.l.b16 %v1165
        %v1294 = vunpack.c.l.b16 %v1166
        %v1295 = vunpack.c.l.b16 %v1167
        %v1296 = vunpack.c.l.b16 %v1168
        %v1297 = vunpack.c.l.b16 %v1169
        %v1298 = vunpack.c.l.b16 %v1170
        %v1299 = vunpack.c.l.b16 %v1171
        %v1300 = vunpack.c.l.b16 %v1172
        %v1301 = vunpack.c.l.b16 %v1173
        %v1302 = vunpack.c.l.b16 %v1174
        %v1303 = vunpack.c.l.b16 %v1175
        %v1304 = vunpack.c.l.b16 %v1176
        %v1305 = vunpack.c.l.b16 %v1177
        %v1306 = vunpack.c.l.b16 %v1178
        %v1307 = vunpack.c.l.b16 %v1179
        %v1308 = vunpack.c.l.b16 %v1180
        %v1309 = vunpack.c.l.b16 %v1181
        %v1310 = vunpack.c.l.b16 %v1182
        %v1311 = vunpack.c.l.b16 %v1183
        %v1312 = vunpack.c.l.b16 %v1184
        %v1313 = vunpack.c.l.b16 %v1185
        %v1314 = vunpack.c.l.b16 %v1186
        %v1315 = vunpack.c.l.b16 %v1187
        %v1316 = vunpack.c.l.b16 %v1188
        %v1317 = vunpack.c.l.b16 %v1189
        %v1318 = vunpack.c.l.b16 %v1190
        %v1319 = vunpack.c.l.b16 %v1191
        %v1320 = vunpack.c.l.b16 %v1192
        %v1321 = vpack.c.b16 %v1258, %v1257
        %v1322 = vpack.c.b16 %v1260, %v1259
        %v1323 = vpack.c.b16 %v1262, %v1261
        %v1324 = vpack.c.b16 %v1264, %v1263
        %v1325 = vpack.c.b16 %v1266, %v1265
        %v1326 = vpack.c.b16 %v1268, %v1267
        %v1327 = vpack.c.b16 %v1270, %v1269
        %v1328 = vpack.c.b16 %v1272, %v1271
        %v1329 = vpack.c.b16 %v1274, %v1273
        %v1330 = vpack.c.b16 %v1276, %v1275
        %v1331 = vpack.c.b16 %v1278, %v1277
        %v1332 = vpack.c.b16 %v1280, %v1279
        %v1333 = vpack.c.b16 %v1282, %v1281
        %v1334 = vpack.c.b16 %v1284, %v1283
        %v1335 = vpack.c.b16 %v1286, %v1285
        %v1336 = vpack.c.b16 %v1288, %v1287
        %v1337 = vpack.c.b16 %v1290, %v1289
        %v1338 = vpack.c.b16 %v1292, %v1291
        %v1339 = vpack.c.b16 %v1294, %v1293
        %v1340 = vpack.c.b16 %v1296, %v1295
        %v1341 = vpack.c.b16 %v1298, %v1297
        %v1342 = vpack.c.b16 %v1300, %v1299
        %v1343 = vpack.c.b16 %v1302, %v1301
        %v1344 = vpack.c.b16 %v1304, %v1303
        %v1345 = vpack.c.b16 %v1306, %v1305
        %v1346 = vpack.c.b16 %v1308, %v1307
        %v1347 = vpack.c.b16 %v1310, %v1309
        %v1348 = vpack.c.b16 %v1312, %v1311
        %v1349 = vpack.c.b16 %v1314, %v1313
        %v1350 = vpack.c.b16 %v1316, %v1315
        %v1351 = vpack.c.b16 %v1318, %v1317
        %v1352 = vpack.c.b16 %v1320, %v1319
        %1385 = vmatpush.bf16.msra.mxu0 %v1328
        %1386 = vmatpush.bf16.msra.mxu0 %v1327
        %1387 = vmatpush.bf16.msra.mxu0 %v1326
        %1388 = vmatpush.bf16.msra.mxu0 %v1325
        %1389 = vmatpush.bf16.msra.mxu0 %v1324
        %1390 = vmatpush.bf16.msra.mxu0 %v1323
        %1391 = vmatpush.bf16.msra.mxu0 %v1322
        %1392 = vmatpush.bf16.msra.mxu0 %v1321
        %1393 = vmatmul.bf16.gmra.mxu0 %v1125
        %v1394 = vpop.f32.mrf.mxu0
        %v1395 = vadd.f32 0.0, %v1394
        %v1396 = vpop.f32.mrf.mxu0
        %1397 = vdwg.mxu0
        %1398 = vmatpush.bf16.msra.mxu0 %v1336
        %1399 = vmatpush.bf16.msra.mxu0 %v1335
        %1400 = vmatpush.bf16.msra.mxu0 %v1334
        %1401 = vmatpush.bf16.msra.mxu0 %v1333
        %1402 = vmatpush.bf16.msra.mxu0 %v1332
        %1403 = vmatpush.bf16.msra.mxu0 %v1331
        %1404 = vmatpush.bf16.msra.mxu0 %v1330
        %1405 = vmatpush.bf16.msra.mxu0 %v1329
        %1406 = vmatmul.bf16.gmra.mxu0 %v1126
        %v1407 = vpop.f32.mrf.mxu0
        %v1408 = vadd.f32 %v1395, %v1407
        %v1409 = vpop.f32.mrf.mxu0
        %1410 = vdwg.mxu0
        %1411 = vmatpush.bf16.msra.mxu0 %v1344
        %1412 = vmatpush.bf16.msra.mxu0 %v1343
        %1413 = vmatpush.bf16.msra.mxu0 %v1342
        %1414 = vmatpush.bf16.msra.mxu0 %v1341
        %1415 = vmatpush.bf16.msra.mxu0 %v1340
        %1416 = vmatpush.bf16.msra.mxu0 %v1339
        %1417 = vmatpush.bf16.msra.mxu0 %v1338
        %1418 = vmatpush.bf16.msra.mxu0 %v1337
        %1419 = vmatmul.bf16.gmra.mxu0 %v1127
        %v1420 = vpop.f32.mrf.mxu0
        %v1421 = vadd.f32 %v1408, %v1420
        %v1422 = vpop.f32.mrf.mxu0
        %1423 = vdwg.mxu0
        %1424 = vmatpush.bf16.msra.mxu0 %v1352
        %1425 = vmatpush.bf16.msra.mxu0 %v1351
        %1426 = vmatpush.bf16.msra.mxu0 %v1350
        %1427 = vmatpush.bf16.msra.mxu0 %v1349
        %1428 = vmatpush.bf16.msra.mxu0 %v1348
        %1429 = vmatpush.bf16.msra.mxu0 %v1347
        %1430 = vmatpush.bf16.msra.mxu0 %v1346
        %1431 = vmatpush.bf16.msra.mxu0 %v1345
        %1432 = vmatmul.bf16.gmra.mxu0 %v1128
        %v1433 = vpop.f32.mrf.mxu0
        %v1434 = vadd.f32 %v1421, %v1433
        %v1435 = vpop.f32.mrf.mxu0
        %1436 = vdwg.mxu0
        %v1437 = vadd.f32 %v574, %v1434
        %1438 = vst [vmem:[%s346] sm:$0xff] %v1437
        %s1439 = sand.u32 %s205, 1
        %s1440 = scalar_lea.sflag [#allocation4], %s1439
        %s1441 = sand.u32 %s205, 1
        %s1442 = smul.addr %s1441, 8
        %s1443 = scalar_lea.vmem [#allocation8], %s1442
        // Predicated region
        $region65: #{tpu_custom_call.1} parent=51 // pred_check
          %p1444 = pneg %p215
        $region66: #{tpu_custom_call.1} parent=51 // pred_check_branch
          %1446 = sbr.rel (%p1444) target = $region68
        $region67: #{tpu_custom_call.1} parent=51 // pred_region
          %1448 = vsyncadd %s1440, 0
          %s1449 = smul.addr %s24, 8
          %s1450 = scalar_lea.hbm %s8, %s1449
          %s1452 = sshll.u32 %s1443, 4
          %s1453 = int_to_ptr.vmem [resolvable:$true] %s1452
          %s1454 = sshll.u32 %s1450, 4
          %s1455 = int_to_ptr.hbm [resolvable:$true] %s1454
          %1457 = dma.vmem_to_hbm [thread:$0]  %s1453, 128, %s1455, %s1440
        $region68: #{tpu_custom_call.1} parent=51 // pred_fallthru
          _
      $region52: #{tpu_custom_call.1} parent=5 // pred_fallthru
        _
      %p1458 = scmp.le.s32.totalorder 2, %s19
      // Predicated region
      $region69: #{tpu_custom_call.1} parent=5 // pred_check
        %p1459 = pneg %p1458
      $region70: #{tpu_custom_call.1} parent=5 // pred_check_branch
        %1461 = sbr.rel (%p1459) target = $region72
      $region71: #{tpu_custom_call.1} parent=5 // pred_region
        %s1462 = ssub.s32 %s19, 2
        // Predicated region
        $region73: #{tpu_custom_call.1} parent=71 // pred_check
          %p1463 = pneg %p221
        $region74: #{tpu_custom_call.1} parent=71 // pred_check_branch
          %1465 = sbr.rel (%p1463) target = $region76
        $region75: #{tpu_custom_call.1} parent=71 // pred_region
          %s1466 = sand.u32 %s206, 1
          %s1467 = scalar_lea.sflag [#allocation4], %s1466
          %s1468 = sand.u32 %s206, 1
          %s1469 = smul.addr %s1468, 8
          %s1470 = scalar_lea.vmem [#allocation8], %s1469
          %1472 = dma.done %s1467, 128
        $region76: #{tpu_custom_call.1} parent=71 // pred_fallthru
          _
      $region72: #{tpu_custom_call.1} parent=5 // pred_fallthru
        _
    $region6: #{tpu_custom_call.1} parent=1 // loop_footer
      %s23 = sadd.s32 1, %s19
    $region7: #{tpu_custom_call.1} parent=1 // loop_footer_branch
      %18 = sbr.rel target = $region3
    $region8: #{tpu_custom_call.1} parent=1 // loop_exit
      _
    %1473 = vsyncpa [#allocation3], 1
    %s1474 = scalar_lea.sflag [#allocation3], 1
    %1475 = vsyncpa %s1474, 1
    %1476 = vsyncpa [#allocation6], 1
    %1477 = vsyncpa [#allocation4], 1
    %s1478 = scalar_lea.sflag [#allocation4], 1
    %1479 = vsyncpa %s1478, 1

</llo_original>
